<compile_context>
chip_gen: v7x
topology: tpu7x:2x2x1
jax: 0.10.0
libtpu: 0.0.40
codegen_flags: <defaults>
</compile_context>

<pallas_src>
import math
import numpy as np
import jax
import jax.numpy as jnp
from jax.experimental import pallas as pl
from jax.experimental.pallas import tpu as pltpu

NEG_SLOPE = 0.1  # F.leaky_relu(..., 0.1)


def _leaky_relu(v, slope=NEG_SLOPE):
    return jnp.where(v >= 0, v, slope * v)


def _round_up(v, m):
    return ((v + m - 1) // m) * m


def _choose_tile_n(n, max_tile=1024):
    """Rows per grid step.  Multiple of 128 (lane-dense (1, tile_n) score
    block); single tile for small graphs; for large N pick >= 4 evenly sized
    tiles so the "parallel" axis load-balances over v7x's two TensorCores."""
    n128 = _round_up(max(n, 1), 128)
    if n128 <= max_tile:
        return n128                       # single tile, no 256-row floor
    num_tiles = max(4, -(-n128 // max_tile))
    if num_tiles % 2:
        num_tiles += 1                    # even tile count for 2-TC balance
    return _round_up(-(-n // num_tiles), 128)


# ----------------------------- Pallas kernel ------------------------------ #
def _pe_score_kernel(x_ref, pos_ref, freq_ref, phase_ref,
                     w1_ref, b1_ref, w2_ref, b2_ref, w3_ref, b3_ref, wa_ref,
                     xx_ref, score_ref):
    # PositionalEncoding forward: xx = x + pe[index]  (dropout identity, eval).
    # pe computed on the EUP: pe[r, c] = sin(pos[r] * freq[c] + phase[c]),
    # phase = pi/2 on odd lanes reproduces the interleaved sin/cos table.
    angle = pos_ref[...] * freq_ref[...] + phase_ref[...]      # (tile_n, C) f32
    xx = x_ref[...] + jnp.sin(angle)
    xx_ref[...] = xx

    # Fused TopKPooling score MLP: bf16 MXU operands, f32 accumulation,
    # f32 VPU elementwise.
    h = jnp.dot(xx.astype(jnp.bfloat16), w1_ref[...],
                preferred_element_type=jnp.float32) + b1_ref[...]
    h = _leaky_relu(h)
    h = jnp.dot(h.astype(jnp.bfloat16), w2_ref[...],
                preferred_element_type=jnp.float32) + b2_ref[...]
    h = _leaky_relu(h)
    h = jnp.dot(h.astype(jnp.bfloat16), w3_ref[...],
                preferred_element_type=jnp.float32) + b3_ref[...]
    h = _leaky_relu(h)

    # Lane-dense score row: (1, 64) . (tile_n, 64)^T -> (1, tile_n).
    # (w_atom already normalized by ||w_atom|| in the wrapper.)
    s_row = jax.lax.dot_general(
        wa_ref[...], h.astype(jnp.bfloat16),
        dimension_numbers=(((1,), (1,)), ((), ())),
        preferred_element_type=jnp.float32)
    score_ref[...] = jnp.tanh(s_row)


def pe_and_scores(x, local_index, params, *, max_tile_n=1024):
    """Runs the Pallas kernel; returns (xx, score).

    xx is exactly PositionalEncoding.forward(x, ibatch); score is the fused
    TopKPooling attention score per node.
    """
    w1, b1, w2, b2, w3, b3, wa = params
    n, c = x.shape
    assert c % 2 == 0, "PositionalEncoding requires an even channel count"

    tile_n = _choose_tile_n(n, max_tile_n)
    num_tiles = -(-n // tile_n)
    n_score = num_tiles * tile_n          # score row padded to full tiles only

    # Per-node position as a tiny (n, 1) f32 column; this replaces the previous
    # (n, c) gathered-pe HBM stream entirely.
    pos = local_index.astype(jnp.float32).reshape(n, 1)

    # Static PE frequency / phase rows (match the PyTorch table exactly):
    #   div_term[i] = exp(2i * (-ln 10000 / C)); even lane -> sin, odd -> cos.
    half = np.exp(np.arange(0, c, 2, dtype=np.float32)
                  * (-math.log(10000.0) / c))
    freq = jnp.asarray(np.repeat(half, 2)[:c].reshape(1, c))
    phase = jnp.asarray(np.tile(np.array([0.0, math.pi / 2.0], np.float32),
                                c // 2).reshape(1, c))

    # Resident weights: bf16 operands for the MXU (f32 accumulate in-kernel);
    # w_atom pre-normalized so the kernel has no reduce/rsqrt.
    w1b = w1.astype(jnp.bfloat16)
    w2b = w2.astype(jnp.bfloat16)
    w3b = w3.astype(jnp.bfloat16)
    wab = (wa / jnp.linalg.norm(wa)).astype(jnp.bfloat16)

    def row_spec(d):
        return pl.BlockSpec((tile_n, d), lambda i: (i, 0))

    def full_spec(arr):
        return pl.BlockSpec(arr.shape, lambda i: (0, 0))

    weight_elems = c * 256 + 256 * 128 + 128 * 64 + 64
    cost = pl.CostEstimate(
        flops=2 * n_score * weight_elems,
        transcendentals=n_score * (c + 1),        # sin per pe elem + tanh/node
        bytes_accessed=(2 * n * c * 4             # x read + xx write
                        + n * 4                   # pos column
                        + n_score * 4             # score row
                        + 2 * weight_elems        # bf16 weights
                        + 4 * (256 + 128 + 64 + 2 * c)))   # biases + freq/phase

    xx, score_pad = pl.pallas_call(
        _pe_score_kernel,
        out_shape=(jax.ShapeDtypeStruct((n, c), jnp.float32),
                   jax.ShapeDtypeStruct((1, n_score), jnp.float32)),
        grid=(num_tiles,),
        in_specs=[row_spec(c), row_spec(1),
                  full_spec(freq), full_spec(phase),
                  full_spec(w1b), full_spec(b1),
                  full_spec(w2b), full_spec(b2),
                  full_spec(w3b), full_spec(b3),
                  full_spec(wab)],
        out_specs=(row_spec(c),
                   pl.BlockSpec((1, tile_n), lambda i: (0, i))),
        compiler_params=pltpu.CompilerParams(
            dimension_semantics=("parallel",)),
        cost_estimate=cost,
    )(x, pos, freq, phase, w1b, b1, w2b, b2, w3b, b3, wab)

    return xx, score_pad[0, :n]


# ------------------------------- glue (JAX) -------------------------------- #
def positional_encoding_table(max_len, channels):
    pe = np.zeros((max_len, channels), np.float32)
    position = np.arange(max_len, dtype=np.float32)[:, None]
    div_term = np.exp(np.arange(0, channels, 2, dtype=np.float32)
                      * (-math.log(10000.0) / channels))
    pe[:, 0::2] = np.sin(position * div_term)
    pe[:, 1::2] = np.cos(position * div_term)
    return jnp.asarray(pe)


def _within_graph_index(batch, n, num_graphs):
    ones = jnp.ones((n,), jnp.int32)
    num_nodes = jax.ops.segment_sum(ones, batch, num_segments=num_graphs)
    cum = jnp.concatenate(
        [jnp.zeros((1,), jnp.int32), jnp.cumsum(num_nodes)[:-1]])
    return jnp.arange(n, dtype=jnp.int32) - cum[batch]


def topk_select(score, ratio, is_on, batch, num_graphs, max_num_nodes):
    """JAX equivalent of `topk(...)` assuming every graph has >= ratio O/N
    atoms (required for the original reshape to (bz, ratio, -1) anyway)."""
    n = score.shape[0]
    local = _within_graph_index(batch, n, num_graphs)

    neg = jnp.finfo(score.dtype).min
    masked = jnp.where(is_on, score, neg)          # only O/N atoms eligible
    dense = jnp.full((num_graphs, max_num_nodes), neg, score.dtype)
    dense = dense.at[batch, local].set(masked)
    dense_idx = jnp.zeros((num_graphs, max_num_nodes), jnp.int32)
    dense_idx = dense_idx.at[batch, local].set(jnp.arange(n, dtype=jnp.int32))

    order = jnp.argsort(-dense, axis=-1)[:, :ratio]              # (B, k)
    perm = dense_idx[jnp.arange(num_graphs)[:, None], order]     # (B, k)
    return perm.reshape(-1), local


def topk_pooling_forward(x, is_on, on_index, batch, params,
                         *, ratio, num_graphs, max_num_nodes):
    n = x.shape[0]
    # within-graph node position (same as PositionalEncoding's `index`)
    local = _within_graph_index(batch, n, num_graphs)

    xx, score = pe_and_scores(x, local, params)

    perm, _ = topk_select(score, ratio, is_on, batch, num_graphs,
                          max_num_nodes)

    x_top = xx[perm] * score[perm][:, None]
    x_top = x_top.reshape(num_graphs, ratio, -1)
    return x_top, perm, score[on_index], on_index


# ------------------------------ parameters --------------------------------- #
def init_params(key, in_channels):
    ks = jax.random.split(key, 7)

    def kaiming_uniform(k, fan_in, shape):
        bound = math.sqrt(6.0 / fan_in)
        return jax.random.uniform(k, shape, jnp.float32, -bound, bound)

    def bias_uniform(k, fan_in, shape):
        bound = 1.0 / math.sqrt(fan_in)
        return jax.random.uniform(k, shape, jnp.float32, -bound, bound)

    w1 = kaiming_uniform(ks[0], in_channels, (in_channels, 256))
    b1 = bias_uniform(ks[1], in_channels, (1, 256))
    w2 = kaiming_uniform(ks[2], 256, (256, 128))
    b2 = bias_uniform(ks[3], 256, (1, 128))
    w3 = kaiming_uniform(ks[4], 128, (128, 64))
    b3 = bias_uniform(ks[5], 128, (1, 64))
    glorot_bound = math.sqrt(6.0 / (1 + 64))
    wa = jax.random.uniform(ks[6], (1, 64), jnp.float32,
                            -glorot_bound, glorot_bound)
    return (w1, b1, w2, b2, w3, b3, wa)


# --------------------------------- main ------------------------------------ #
if __name__ == "__main__":
    key = jax.random.PRNGKey(0)
    k_x, k_p = jax.random.split(key)

    in_channels = 32
    ratio = 1
    num_graphs = 2
    nodes_per_graph = [7, 9]
    n_total = sum(nodes_per_graph)
    max_num_nodes = max(nodes_per_graph)

    batch_np = np.repeat(np.arange(num_graphs), nodes_per_graph).astype(np.int32)
    batch = jnp.asarray(batch_np)

    x = jax.random.normal(k_x, (n_total, in_channels), jnp.float32)

    # TODO(synk): RDKit `chems` (generate_O_N) has no Pallas/JAX equivalent;
    # the O/N-atom membership is provided as a host-side boolean mask instead.
    is_on_np = np.zeros(n_total, dtype=bool)
    is_on_np[[1, 3, 5, 8, 10, 14]] = True          # each graph has >= 1 O/N atom
    is_on = jnp.asarray(is_on_np)
    on_index = jnp.asarray(np.nonzero(is_on_np)[0].astype(np.int32))

    params = init_params(k_p, in_channels)

    # Sanity: the kernel's xx output == PositionalEncoding.forward(x, ibatch)
    # (pe now computed in-kernel; compare against the NumPy sin/cos table).
    local = _within_graph_index(batch, n_total, num_graphs)
    xx_kernel, score_kernel = pe_and_scores(x, local, params)
    pe_table = positional_encoding_table(500, in_channels)
    xx_ref = x + pe_table[local]
    assert jnp.allclose(xx_kernel, xx_ref, atol=5e-3), "xx mismatch"

    # Loose score check (kernel uses bf16 MXU operands with f32 accumulation).
    w1, b1, w2, b2, w3, b3, wa = params
    h = _leaky_relu(xx_ref @ w1 + b1)
    h = _leaky_relu(h @ w2 + b2)
    h = _leaky_relu(h @ w3 + b3)
    score_ref = jnp.tanh((h @ wa.T)[:, 0] / jnp.linalg.norm(wa))
    assert jnp.allclose(score_kernel, score_ref, atol=5e-2), "score mismatch"

    x_top, perm, score_on, on_idx = topk_pooling_forward(
        x, is_on, on_index, batch, params,
        ratio=ratio, num_graphs=num_graphs, max_num_nodes=max_num_nodes)

    jax.block_until_ready((x_top, perm, score_on))
    assert x_top.shape == (num_graphs, ratio, in_channels)
    assert perm.shape == (num_graphs * ratio,)
    assert score_on.shape == (on_index.shape[0],)
    print("KERNEL_OK")
</pallas_src>

<mosaic_0001>
module attributes {stable_mosaic.version = 11 : i64} {
  func.func @_pe_score_kernel(%arg0: i32, %arg1: memref<128x32xf32, #tpu.memory_space<vmem>>, %arg2: memref<128x1xf32, #tpu.memory_space<vmem>>, %arg3: memref<1x32xf32, #tpu.memory_space<vmem>>, %arg4: memref<1x32xf32, #tpu.memory_space<vmem>>, %arg5: memref<32x256xbf16, #tpu.memory_space<vmem>>, %arg6: memref<1x256xf32, #tpu.memory_space<vmem>>, %arg7: memref<256x128xbf16, #tpu.memory_space<vmem>>, %arg8: memref<1x128xf32, #tpu.memory_space<vmem>>, %arg9: memref<128x64xbf16, #tpu.memory_space<vmem>>, %arg10: memref<1x64xf32, #tpu.memory_space<vmem>>, %arg11: memref<1x64xbf16, #tpu.memory_space<vmem>>, %arg12: memref<128x32xf32, #tpu.memory_space<vmem>>, %arg13: memref<1x128xf32, #tpu.memory_space<vmem>>) attributes {dimension_semantics = [#tpu.dimension_semantics<parallel>], iteration_bounds = array<i64: 1>, scalar_prefetch = 0 : i64, scratch_operands = 0 : i64, tpu.core_type = #tpu.core_type<tc>, window_params = [{transform_indices = @transform_0, window_bounds = array<i64: 128, 32>}, {transform_indices = @transform_1, window_bounds = array<i64: 128, 1>}, {pipeline_mode = #tpu.pipeline_mode<synchronous>, transform_indices = @transform_2, window_bounds = array<i64: 1, 32>}, {pipeline_mode = #tpu.pipeline_mode<synchronous>, transform_indices = @transform_3, window_bounds = array<i64: 1, 32>}, {pipeline_mode = #tpu.pipeline_mode<synchronous>, transform_indices = @transform_4, window_bounds = array<i64: 32, 256>}, {pipeline_mode = #tpu.pipeline_mode<synchronous>, transform_indices = @transform_5, window_bounds = array<i64: 1, 256>}, {pipeline_mode = #tpu.pipeline_mode<synchronous>, transform_indices = @transform_6, window_bounds = array<i64: 256, 128>}, {pipeline_mode = #tpu.pipeline_mode<synchronous>, transform_indices = @transform_7, window_bounds = array<i64: 1, 128>}, {pipeline_mode = #tpu.pipeline_mode<synchronous>, transform_indices = @transform_8, window_bounds = array<i64: 128, 64>}, {pipeline_mode = #tpu.pipeline_mode<synchronous>, transform_indices = @transform_9, window_bounds = array<i64: 1, 64>}, {pipeline_mode = #tpu.pipeline_mode<synchronous>, transform_indices = @transform_10, window_bounds = array<i64: 1, 64>}, {transform_indices = @transform_11, window_bounds = array<i64: 128, 32>}, {transform_indices = @transform_12, window_bounds = array<i64: 1, 128>}]} {
    %c0 = arith.constant 0 : index
    %c0_0 = arith.constant 0 : index
    %0 = vector.load %arg2[%c0, %c0_0] : memref<128x1xf32, #tpu.memory_space<vmem>>, vector<128x1xf32>
    %c0_1 = arith.constant 0 : index
    %c0_2 = arith.constant 0 : index
    %1 = vector.load %arg3[%c0_1, %c0_2] : memref<1x32xf32, #tpu.memory_space<vmem>>, vector<1x32xf32>
    %2 = vector.broadcast %0 : vector<128x1xf32> to vector<128x32xf32>
    %3 = vector.broadcast %1 : vector<1x32xf32> to vector<128x32xf32>
    %4 = arith.mulf %2, %3 : vector<128x32xf32>
    %c0_3 = arith.constant 0 : index
    %c0_4 = arith.constant 0 : index
    %5 = vector.load %arg4[%c0_3, %c0_4] : memref<1x32xf32, #tpu.memory_space<vmem>>, vector<1x32xf32>
    %6 = vector.broadcast %5 : vector<1x32xf32> to vector<128x32xf32>
    %7 = arith.addf %4, %6 : vector<128x32xf32>
    %c0_5 = arith.constant 0 : index
    %c0_6 = arith.constant 0 : index
    %8 = vector.load %arg1[%c0_5, %c0_6] : memref<128x32xf32, #tpu.memory_space<vmem>>, vector<128x32xf32>
    %9 = math.sin %7 : vector<128x32xf32>
    %10 = arith.addf %8, %9 : vector<128x32xf32>
    %c0_7 = arith.constant 0 : index
    %c0_8 = arith.constant 0 : index
    %11 = vector.load %arg12[%c0_7, %c0_8] : memref<128x32xf32, #tpu.memory_space<vmem>>, vector<128x32xf32>
    tpu.vector_store %arg12[%c0_7, %c0_8], %10 {strides = array<i32>} : memref<128x32xf32, #tpu.memory_space<vmem>>, vector<128x32xf32>,
    %12 = arith.truncf %10 : vector<128x32xf32> to vector<128x32xbf16>
    %c0_9 = arith.constant 0 : index
    %c0_10 = arith.constant 0 : index
    %13 = vector.load %arg5[%c0_9, %c0_10] : memref<32x256xbf16, #tpu.memory_space<vmem>>, vector<32x256xbf16>
    %cst = arith.constant dense<0.000000e+00> : vector<128x256xf32>
    %14 = tpu.matmul %12, %13, %cst {dimension_numbers = #tpu.dot_dimension_numbers<[1], [0], [0], [1], [0, 0, 1, 1], [], []>} : vector<128x32xbf16>, vector<32x256xbf16>, vector<128x256xf32> -> vector<128x256xf32>
    %c0_11 = arith.constant 0 : index
    %c0_12 = arith.constant 0 : index
    %15 = vector.load %arg6[%c0_11, %c0_12] : memref<1x256xf32, #tpu.memory_space<vmem>>, vector<1x256xf32>
    %16 = vector.broadcast %15 : vector<1x256xf32> to vector<128x256xf32>
    %17 = arith.addf %14, %16 : vector<128x256xf32>
    %cst_13 = arith.constant 0.000000e+00 : f32
    %18 = vector.broadcast %cst_13 : f32 to vector<128x256xf32>
    %19 = arith.cmpf oge, %17, %18 : vector<128x256xf32>
    %cst_14 = arith.constant 1.000000e-01 : f32
    %20 = vector.broadcast %cst_14 : f32 to vector<128x256xf32>
    %21 = arith.mulf %20, %17 : vector<128x256xf32>
    %22 = arith.select %19, %17, %21 : vector<128x256xi1>, vector<128x256xf32>
    %23 = arith.truncf %22 : vector<128x256xf32> to vector<128x256xbf16>
    %c0_15 = arith.constant 0 : index
    %c0_16 = arith.constant 0 : index
    %24 = vector.load %arg7[%c0_15, %c0_16] : memref<256x128xbf16, #tpu.memory_space<vmem>>, vector<256x128xbf16>
    %cst_17 = arith.constant dense<0.000000e+00> : vector<128x128xf32>
    %25 = tpu.matmul %23, %24, %cst_17 {dimension_numbers = #tpu.dot_dimension_numbers<[1], [0], [0], [1], [0, 0, 1, 1], [], []>} : vector<128x256xbf16>, vector<256x128xbf16>, vector<128x128xf32> -> vector<128x128xf32>
    %c0_18 = arith.constant 0 : index
    %c0_19 = arith.constant 0 : index
    %26 = vector.load %arg8[%c0_18, %c0_19] : memref<1x128xf32, #tpu.memory_space<vmem>>, vector<1x128xf32>
    %27 = vector.broadcast %26 : vector<1x128xf32> to vector<128x128xf32>
    %28 = arith.addf %25, %27 : vector<128x128xf32>
    %cst_20 = arith.constant 0.000000e+00 : f32
    %29 = vector.broadcast %cst_20 : f32 to vector<128x128xf32>
    %30 = arith.cmpf oge, %28, %29 : vector<128x128xf32>
    %cst_21 = arith.constant 1.000000e-01 : f32
    %31 = vector.broadcast %cst_21 : f32 to vector<128x128xf32>
    %32 = arith.mulf %31, %28 : vector<128x128xf32>
    %33 = arith.select %30, %28, %32 : vector<128x128xi1>, vector<128x128xf32>
    %34 = arith.truncf %33 : vector<128x128xf32> to vector<128x128xbf16>
    %c0_22 = arith.constant 0 : index
    %c0_23 = arith.constant 0 : index
    %35 = vector.load %arg9[%c0_22, %c0_23] : memref<128x64xbf16, #tpu.memory_space<vmem>>, vector<128x64xbf16>
    %cst_24 = arith.constant dense<0.000000e+00> : vector<128x64xf32>
    %36 = tpu.matmul %34, %35, %cst_24 {dimension_numbers = #tpu.dot_dimension_numbers<[1], [0], [0], [1], [0, 0, 1, 1], [], []>} : vector<128x128xbf16>, vector<128x64xbf16>, vector<128x64xf32> -> vector<128x64xf32>
    %c0_25 = arith.constant 0 : index
    %c0_26 = arith.constant 0 : index
    %37 = vector.load %arg10[%c0_25, %c0_26] : memref<1x64xf32, #tpu.memory_space<vmem>>, vector<1x64xf32>
    %38 = vector.broadcast %37 : vector<1x64xf32> to vector<128x64xf32>
    %39 = arith.addf %36, %38 : vector<128x64xf32>
    %cst_27 = arith.constant 0.000000e+00 : f32
    %40 = vector.broadcast %cst_27 : f32 to vector<128x64xf32>
    %41 = arith.cmpf oge, %39, %40 : vector<128x64xf32>
    %cst_28 = arith.constant 1.000000e-01 : f32
    %42 = vector.broadcast %cst_28 : f32 to vector<128x64xf32>
    %43 = arith.mulf %42, %39 : vector<128x64xf32>
    %44 = arith.select %41, %39, %43 : vector<128x64xi1>, vector<128x64xf32>
    %c0_29 = arith.constant 0 : index
    %c0_30 = arith.constant 0 : index
    %45 = vector.load %arg11[%c0_29, %c0_30] : memref<1x64xbf16, #tpu.memory_space<vmem>>, vector<1x64xbf16>
    %46 = arith.truncf %44 : vector<128x64xf32> to vector<128x64xbf16>
    %cst_31 = arith.constant dense<0.000000e+00> : vector<1x128xf32>
    %47 = tpu.matmul %45, %46, %cst_31 {dimension_numbers = #tpu.dot_dimension_numbers<[1], [1], [0], [0], [0, 0, 1, 0], [], []>} : vector<1x64xbf16>, vector<128x64xbf16>, vector<1x128xf32> -> vector<1x128xf32>
    %48 = math.tanh %47 : vector<1x128xf32>
    %c0_32 = arith.constant 0 : index
    %c0_33 = arith.constant 0 : index
    %49 = vector.load %arg13[%c0_32, %c0_33] : memref<1x128xf32, #tpu.memory_space<vmem>>, vector<1x128xf32>
    tpu.vector_store %arg13[%c0_32, %c0_33], %48 {strides = array<i32>} : memref<1x128xf32, #tpu.memory_space<vmem>>, vector<1x128xf32>,
    return
  }
  func.func @transform_0(%arg0: i32) -> (i32, i32) {
    %c0_i32 = arith.constant 0 : i32
    %c0_i32_0 = arith.constant 0 : i32
    return %arg0, %c0_i32 : i32, i32
  }
  func.func @transform_1(%arg0: i32) -> (i32, i32) {
    %c0_i32 = arith.constant 0 : i32
    %c0_i32_0 = arith.constant 0 : i32
    return %arg0, %c0_i32 : i32, i32
  }
  func.func @transform_2(%arg0: i32) -> (i32, i32) {
    %c0_i32 = arith.constant 0 : i32
    %c0_i32_0 = arith.constant 0 : i32
    %c0_i32_1 = arith.constant 0 : i32
    return %c0_i32, %c0_i32_0 : i32, i32
  }
  func.func @transform_3(%arg0: i32) -> (i32, i32) {
    %c0_i32 = arith.constant 0 : i32
    %c0_i32_0 = arith.constant 0 : i32
    %c0_i32_1 = arith.constant 0 : i32
    return %c0_i32, %c0_i32_0 : i32, i32
  }
  func.func @transform_4(%arg0: i32) -> (i32, i32) {
    %c0_i32 = arith.constant 0 : i32
    %c0_i32_0 = arith.constant 0 : i32
    %c0_i32_1 = arith.constant 0 : i32
    return %c0_i32, %c0_i32_0 : i32, i32
  }
  func.func @transform_5(%arg0: i32) -> (i32, i32) {
    %c0_i32 = arith.constant 0 : i32
    %c0_i32_0 = arith.constant 0 : i32
    %c0_i32_1 = arith.constant 0 : i32
    return %c0_i32, %c0_i32_0 : i32, i32
  }
  func.func @transform_6(%arg0: i32) -> (i32, i32) {
    %c0_i32 = arith.constant 0 : i32
    %c0_i32_0 = arith.constant 0 : i32
    %c0_i32_1 = arith.constant 0 : i32
    return %c0_i32, %c0_i32_0 : i32, i32
  }
  func.func @transform_7(%arg0: i32) -> (i32, i32) {
    %c0_i32 = arith.constant 0 : i32
    %c0_i32_0 = arith.constant 0 : i32
    %c0_i32_1 = arith.constant 0 : i32
    return %c0_i32, %c0_i32_0 : i32, i32
  }
  func.func @transform_8(%arg0: i32) -> (i32, i32) {
    %c0_i32 = arith.constant 0 : i32
    %c0_i32_0 = arith.constant 0 : i32
    %c0_i32_1 = arith.constant 0 : i32
    return %c0_i32, %c0_i32_0 : i32, i32
  }
  func.func @transform_9(%arg0: i32) -> (i32, i32) {
    %c0_i32 = arith.constant 0 : i32
    %c0_i32_0 = arith.constant 0 : i32
    %c0_i32_1 = arith.constant 0 : i32
    return %c0_i32, %c0_i32_0 : i32, i32
  }
  func.func @transform_10(%arg0: i32) -> (i32, i32) {
    %c0_i32 = arith.constant 0 : i32
    %c0_i32_0 = arith.constant 0 : i32
    %c0_i32_1 = arith.constant 0 : i32
    return %c0_i32, %c0_i32_0 : i32, i32
  }
  func.func @transform_11(%arg0: i32) -> (i32, i32) {
    %c0_i32 = arith.constant 0 : i32
    %c0_i32_0 = arith.constant 0 : i32
    return %arg0, %c0_i32 : i32, i32
  }
  func.func @transform_12(%arg0: i32) -> (i32, i32) {
    %c0_i32 = arith.constant 0 : i32
    %c0_i32_0 = arith.constant 0 : i32
    return %c0_i32, %arg0 : i32, i32
  }
}

</mosaic_0001>

<llo_original>
// kernel: tpu_custom_call.1
$region0: #{tpu_custom_call.1}
  #allocation0 [shape = 'u32[]', space=smem, size = 0x4, offset = 0x4, fixed_abs, tag = 'smem constant byte address 0x4 - core index']
  #allocation1 [shape = 'u32[144,128]{1,0:T(1,128)}', space=vmem, size = 0x12000, scoped, tag = 'internal scratch']
  %s0 = inlined_call_operand.hbm [shape: f32[16,32], index: 0, kind: input, shape index: {}]
  %s1 = inlined_call_operand.vmem [shape: f32[16,1], index: 1, kind: input, shape index: {}]
  %s2 = inlined_call_operand.vmem [shape: f32[1,32], index: 2, kind: input, shape index: {}]
  %s3 = inlined_call_operand.vmem [shape: f32[1,32], index: 3, kind: input, shape index: {}]
  %s4 = inlined_call_operand.hbm [shape: bf16[32,256], index: 4, kind: input, shape index: {}]
  %s5 = inlined_call_operand.vmem [shape: f32[1,256], index: 5, kind: input, shape index: {}]
  %s6 = inlined_call_operand.vmem [shape: bf16[256,128], index: 6, kind: input, shape index: {}]
  %s7 = inlined_call_operand.vmem [shape: f32[1,128], index: 7, kind: input, shape index: {}]
  %s8 = inlined_call_operand.vmem [shape: bf16[128,64], index: 8, kind: input, shape index: {}]
  %s9 = inlined_call_operand.vmem [shape: f32[1,64], index: 9, kind: input, shape index: {}]
  %s10 = inlined_call_operand.vmem [shape: bf16[1,64], index: 10, kind: input, shape index: {}]
  %s11 = inlined_call_operand.hbm [shape: f32[16,32], index: 11, kind: output, shape index: {0}]
  %s12 = inlined_call_operand.hbm [shape: f32[1,128], index: 12, kind: output, shape index: {1}]
  %13 = xla_tuple %s11, %s12
  %s14 = sld [smem:[#allocation0]]
  $region70: #{tpu_custom_call.1} parent=0
    _
  %s16 = ssub.s32 1, %s14
  %s17 = scalar_select 0, %s16, %s14
  $region1: #{tpu_custom_call.1} parent=0
    #allocation2 [shape = 'u8[65536]{0}', space=vmem, size = 0x10000, scoped, tag = 'input window, operand 0, single buffered']
    #allocation3 [shape = 's32[1]{0}', space=sflag, size = 0x4, scoped, tag = 'scoped memory for tpu_custom_call.1']
    #allocation4 [shape = 's32[1]{0}', space=sflag, size = 0x4, scoped, tag = 'scoped memory for tpu_custom_call.1']
    #allocation5 [shape = 'u8[16384]{0}', space=vmem, size = 0x4000, scoped, tag = 'input window, operand 4, single buffered']
    #allocation6 [shape = 's32[1]{0}', space=sflag, size = 0x4, scoped, tag = 'scoped memory for tpu_custom_call.1']
    #allocation7 [shape = 'u8[65536]{0}', space=vmem, size = 0x10000, scoped, tag = 'output window, operand 0, single buffered']
    #allocation8 [shape = 'u8[512]{0}', space=vmem, size = 0x400, scoped, tag = 'output window, operand 1, single buffered']
    #allocation9 [shape = 's32[1]{0}', space=sflag, size = 0x4, scoped, tag = 'scoped memory for tpu_custom_call.1']
    %18 = vsyncpa [#allocation3], 0
    %19 = vsyncpa [#allocation6], 0
    %20 = vsyncpa [#allocation4], 0
    %21 = vsyncpa [#allocation9], 0
    // Predicated region
    $region2: #{tpu_custom_call.1} parent=1 // pred_check
      _
    $region3: #{tpu_custom_call.1} parent=1 // pred_check_branch
      %23 = sbr.rel (0) target = $region5
    $region4: #{tpu_custom_call.1} parent=1 // pred_region
      %s25 = ssub.s32 2048, 256
      %26 = vsyncadd [#allocation3], %s25
      %s27 = sshll.u32 [#allocation2], 4
      %s28 = int_to_ptr.vmem [resolvable:$true] %s27
      %33 = dma.hbm_to_vmem [thread:$0]  %s0, 256, %s28, [#allocation3], 128, 128, 8
    $region5: #{tpu_custom_call.1} parent=1 // pred_fallthru
      _
    // Predicated region
    $region6: #{tpu_custom_call.1} parent=1 // pred_check
      _
    $region7: #{tpu_custom_call.1} parent=1 // pred_check_branch
      %35 = sbr.rel (0) target = $region9
    $region8: #{tpu_custom_call.1} parent=1 // pred_region
      _
    $region9: #{tpu_custom_call.1} parent=1 // pred_fallthru
      _
    // Predicated region
    $region10: #{tpu_custom_call.1} parent=1 // pred_check
      _
    $region11: #{tpu_custom_call.1} parent=1 // pred_check_branch
      %37 = sbr.rel (0) target = $region13
    $region12: #{tpu_custom_call.1} parent=1 // pred_region
      _
    $region13: #{tpu_custom_call.1} parent=1 // pred_fallthru
      _
    // Predicated region
    $region14: #{tpu_custom_call.1} parent=1 // pred_check
      _
    $region15: #{tpu_custom_call.1} parent=1 // pred_check_branch
      %39 = sbr.rel (0) target = $region17
    $region16: #{tpu_custom_call.1} parent=1 // pred_region
      _
    $region17: #{tpu_custom_call.1} parent=1 // pred_fallthru
      _
    // Predicated region
    $region18: #{tpu_custom_call.1} parent=1 // pred_check
      _
    $region19: #{tpu_custom_call.1} parent=1 // pred_check_branch
      %41 = sbr.rel (0) target = $region21
    $region20: #{tpu_custom_call.1} parent=1 // pred_region
      %s43 = ssub.s32 512, 512
      %44 = vsyncadd [#allocation6], %s43
      %s45 = sshll.u32 [#allocation5], 4
      %s46 = int_to_ptr.vmem [resolvable:$true] %s45
      %51 = dma.hbm_to_vmem [thread:$0]  %s4, 512, %s46, [#allocation6], 128, 128, 8
    $region21: #{tpu_custom_call.1} parent=1 // pred_fallthru
      _
    // Predicated region
    $region22: #{tpu_custom_call.1} parent=1 // pred_check
      _
    $region23: #{tpu_custom_call.1} parent=1 // pred_check_branch
      %53 = sbr.rel (0) target = $region25
    $region24: #{tpu_custom_call.1} parent=1 // pred_region
      _
    $region25: #{tpu_custom_call.1} parent=1 // pred_fallthru
      _
    // Predicated region
    $region26: #{tpu_custom_call.1} parent=1 // pred_check
      _
    $region27: #{tpu_custom_call.1} parent=1 // pred_check_branch
      %55 = sbr.rel (0) target = $region29
    $region28: #{tpu_custom_call.1} parent=1 // pred_region
      _
    $region29: #{tpu_custom_call.1} parent=1 // pred_fallthru
      _
    // Predicated region
    $region30: #{tpu_custom_call.1} parent=1 // pred_check
      _
    $region31: #{tpu_custom_call.1} parent=1 // pred_check_branch
      %57 = sbr.rel (0) target = $region33
    $region32: #{tpu_custom_call.1} parent=1 // pred_region
      _
    $region33: #{tpu_custom_call.1} parent=1 // pred_fallthru
      _
    // Predicated region
    $region34: #{tpu_custom_call.1} parent=1 // pred_check
      _
    $region35: #{tpu_custom_call.1} parent=1 // pred_check_branch
      %59 = sbr.rel (0) target = $region37
    $region36: #{tpu_custom_call.1} parent=1 // pred_region
      _
    $region37: #{tpu_custom_call.1} parent=1 // pred_fallthru
      _
    // Predicated region
    $region38: #{tpu_custom_call.1} parent=1 // pred_check
      _
    $region39: #{tpu_custom_call.1} parent=1 // pred_check_branch
      %61 = sbr.rel (0) target = $region41
    $region40: #{tpu_custom_call.1} parent=1 // pred_region
      _
    $region41: #{tpu_custom_call.1} parent=1 // pred_fallthru
      _
    // Predicated region
    $region42: #{tpu_custom_call.1} parent=1 // pred_check
      _
    $region43: #{tpu_custom_call.1} parent=1 // pred_check_branch
      %63 = sbr.rel (0) target = $region45
    $region44: #{tpu_custom_call.1} parent=1 // pred_region
      _
    $region45: #{tpu_custom_call.1} parent=1 // pred_fallthru
      _
    // Predicated region
    $region46: #{tpu_custom_call.1} parent=1 // pred_check
      _
    $region47: #{tpu_custom_call.1} parent=1 // pred_check_branch
      %65 = sbr.rel (0) target = $region49
    $region48: #{tpu_custom_call.1} parent=1 // pred_region
      %66 = dma.done [#allocation3], 2048
    $region49: #{tpu_custom_call.1} parent=1 // pred_fallthru
      _
    // Predicated region
    $region50: #{tpu_custom_call.1} parent=1 // pred_check
      _
    $region51: #{tpu_custom_call.1} parent=1 // pred_check_branch
      %68 = sbr.rel (0) target = $region53
    $region52: #{tpu_custom_call.1} parent=1 // pred_region
      %69 = dma.done [#allocation6], 512
    $region53: #{tpu_custom_call.1} parent=1 // pred_fallthru
      _
    %v71 = vld [vmem:[%s1] sm:$0xff]
    %v72 = vld [vmem:[%s1 + $0x8] sm:$0xff]
    %v73 = vld [vmem:[%s1 + $0x10] sm:$0xff]
    %v74 = vld [vmem:[%s1 + $0x18] sm:$0xff]
    %v75 = vld [vmem:[%s1 + $0x20] sm:$0xff]
    %v76 = vld [vmem:[%s1 + $0x28] sm:$0xff]
    %v77 = vld [vmem:[%s1 + $0x30] sm:$0xff]
    %v78 = vld [vmem:[%s1 + $0x38] sm:$0xff]
    %v79 = vld [vmem:[%s1 + $0x40] sm:$0xff]
    %v80 = vld [vmem:[%s1 + $0x48] sm:$0xff]
    %v81 = vld [vmem:[%s1 + $0x50] sm:$0xff]
    %v82 = vld [vmem:[%s1 + $0x58] sm:$0xff]
    %v83 = vld [vmem:[%s1 + $0x60] sm:$0xff]
    %v84 = vld [vmem:[%s1 + $0x68] sm:$0xff]
    %v85 = vld [vmem:[%s1 + $0x70] sm:$0xff]
    %v86 = vld [vmem:[%s1 + $0x78] sm:$0xff]
    %v87 = vld [vmem:[%s2] sm:$0x1]
    %89 = vset.pattern.permute.xlu0 0
    %90 = vperm.xlu0 %89, %v71
    %v91 = vpop.permute.xlu0 %90
    %94 = vset.pattern.permute.xlu0 0
    %95 = vperm.xlu0 %94, %v72
    %v96 = vpop.permute.xlu0 %95
    %99 = vset.pattern.permute.xlu0 0
    %100 = vperm.xlu0 %99, %v73
    %v101 = vpop.permute.xlu0 %100
    %104 = vset.pattern.permute.xlu0 0
    %105 = vperm.xlu0 %104, %v74
    %v106 = vpop.permute.xlu0 %105
    %109 = vset.pattern.permute.xlu0 0
    %110 = vperm.xlu0 %109, %v75
    %v111 = vpop.permute.xlu0 %110
    %114 = vset.pattern.permute.xlu0 0
    %115 = vperm.xlu0 %114, %v76
    %v116 = vpop.permute.xlu0 %115
    %119 = vset.pattern.permute.xlu0 0
    %120 = vperm.xlu0 %119, %v77
    %v121 = vpop.permute.xlu0 %120
    %124 = vset.pattern.permute.xlu0 0
    %125 = vperm.xlu0 %124, %v78
    %v126 = vpop.permute.xlu0 %125
    %129 = vset.pattern.permute.xlu0 0
    %130 = vperm.xlu0 %129, %v79
    %v131 = vpop.permute.xlu0 %130
    %134 = vset.pattern.permute.xlu0 0
    %135 = vperm.xlu0 %134, %v80
    %v136 = vpop.permute.xlu0 %135
    %139 = vset.pattern.permute.xlu0 0
    %140 = vperm.xlu0 %139, %v81
    %v141 = vpop.permute.xlu0 %140
    %144 = vset.pattern.permute.xlu0 0
    %145 = vperm.xlu0 %144, %v82
    %v146 = vpop.permute.xlu0 %145
    %149 = vset.pattern.permute.xlu0 0
    %150 = vperm.xlu0 %149, %v83
    %v151 = vpop.permute.xlu0 %150
    %154 = vset.pattern.permute.xlu0 0
    %155 = vperm.xlu0 %154, %v84
    %v156 = vpop.permute.xlu0 %155
    %159 = vset.pattern.permute.xlu0 0
    %160 = vperm.xlu0 %159, %v85
    %v161 = vpop.permute.xlu0 %160
    %164 = vset.pattern.permute.xlu0 0
    %165 = vperm.xlu0 %164, %v86
    %v166 = vpop.permute.xlu0 %165
    %v169 = vlaneseq
    %v170 = vshrl.u32 %v169, 7
    %v171 = vsub.s32 0, %v170
    %v172 = vrot.slane %v87, %v171
    %v174 = vmul.f32 %v91, %v172
    %v175 = vmul.f32 %v96, %v172
    %v176 = vmul.f32 %v101, %v172
    %v177 = vmul.f32 %v106, %v172
    %v178 = vmul.f32 %v111, %v172
    %v179 = vmul.f32 %v116, %v172
    %v180 = vmul.f32 %v121, %v172
    %v181 = vmul.f32 %v126, %v172
    %v182 = vmul.f32 %v131, %v172
    %v183 = vmul.f32 %v136, %v172
    %v184 = vmul.f32 %v141, %v172
    %v185 = vmul.f32 %v146, %v172
    %v186 = vmul.f32 %v151, %v172
    %v187 = vmul.f32 %v156, %v172
    %v188 = vmul.f32 %v161, %v172
    %v189 = vmul.f32 %v166, %v172
    %v190 = vld [vmem:[%s3] sm:$0x1]
    %v192 = vlaneseq
    %v193 = vshrl.u32 %v192, 7
    %v194 = vsub.s32 0, %v193
    %v195 = vrot.slane %v190, %v194
    %v197 = vadd.f32 %v174, %v195
    %v198 = vadd.f32 %v175, %v195
    %v199 = vadd.f32 %v176, %v195
    %v200 = vadd.f32 %v177, %v195
    %v201 = vadd.f32 %v178, %v195
    %v202 = vadd.f32 %v179, %v195
    %v203 = vadd.f32 %v180, %v195
    %v204 = vadd.f32 %v181, %v195
    %v205 = vadd.f32 %v182, %v195
    %v206 = vadd.f32 %v183, %v195
    %v207 = vadd.f32 %v184, %v195
    %v208 = vadd.f32 %v185, %v195
    %v209 = vadd.f32 %v186, %v195
    %v210 = vadd.f32 %v187, %v195
    %v211 = vadd.f32 %v188, %v195
    %v212 = vadd.f32 %v189, %v195
    %v213 = vld [vmem:[#allocation2] sm:$0xff]
    %v214 = vld [vmem:[#allocation2 + $0x8] sm:$0xff]
    %v215 = vld [vmem:[#allocation2 + $0x10] sm:$0xff]
    %v216 = vld [vmem:[#allocation2 + $0x18] sm:$0xff]
    %v217 = vld [vmem:[#allocation2 + $0x20] sm:$0xff]
    %v218 = vld [vmem:[#allocation2 + $0x28] sm:$0xff]
    %v219 = vld [vmem:[#allocation2 + $0x30] sm:$0xff]
    %v220 = vld [vmem:[#allocation2 + $0x38] sm:$0xff]
    %v221 = vld [vmem:[#allocation2 + $0x40] sm:$0xff]
    %v222 = vld [vmem:[#allocation2 + $0x48] sm:$0xff]
    %v223 = vld [vmem:[#allocation2 + $0x50] sm:$0xff]
    %v224 = vld [vmem:[#allocation2 + $0x58] sm:$0xff]
    %v225 = vld [vmem:[#allocation2 + $0x60] sm:$0xff]
    %v226 = vld [vmem:[#allocation2 + $0x68] sm:$0xff]
    %v227 = vld [vmem:[#allocation2 + $0x70] sm:$0xff]
    %v228 = vld [vmem:[#allocation2 + $0x78] sm:$0xff]
    %v229 = vand.u32 2147483647, %v197
    %vm230 = vcmp.le.f32.partialorder %v229, 0.7853982
    %vm231 = vcmp.lt.s32.totalorder %v197, 0
    %v232 = vand.u32 %v197, 2139095040
    %v233 = vshrl.u32 %v232, 23
    %v234 = vsub.s32 %v233, 127
    %v235 = vand.u32 2147483647, %v197
    %v236 = vand.u32 %v235, 8388607
    %v237 = vor.u32 %v236, 8388608
    %v238 = vsub.s32 0, %v237
    %v239 = vadd.s32 %v234, 1
    %vm240 = vcmp.gt.s32.totalorder %v239, 0
    %v241 = vsel %vm240, %v239, 0
    %v242 = vshrl.u32 %v241, 5
    %v243 = vand.u32 %v241, 31
    %v244 = vsub.s32 32, %v243
    %v245 = vshrl.u32 683565275, %v244
    %v246 = vshll.u32 683565275, %v243
    %v247 = vshrl.u32 2475754826, %v244
    %v248 = vor.u32 %v246, %v247
    %v249 = vshll.u32 2475754826, %v243
    %v250 = vshrl.u32 2131351028, %v244
    %v251 = vor.u32 %v249, %v250
    %v252 = vshll.u32 2131351028, %v243
    %v253 = vshrl.u32 2102212464, %v244
    %v254 = vor.u32 %v252, %v253
    %v255 = vshll.u32 2102212464, %v243
    %v256 = vshrl.u32 920167782, %v244
    %v257 = vor.u32 %v255, %v256
    %v258 = vshll.u32 920167782, %v243
    %v259 = vshrl.u32 1326507024, %v244
    %v260 = vor.u32 %v258, %v259
    %vm261 = vcmp.lt.s32.totalorder %v242, 1
    %vm262 = vcmp.lt.s32.totalorder %v242, 2
    %vm263 = vcmp.lt.s32.totalorder %v242, 3
    %vm264 = vcmp.lt.s32.totalorder %v242, 4
    %v265 = vsel %vm261, %v245, %v248
    %v266 = vsel %vm264, %v254, 2102212464
    %v267 = vsel %vm263, %v251, %v266
    %v268 = vsel %vm262, %v265, %v267
    %v269 = vsel %vm261, %v248, %v251
    %v270 = vsel %vm264, %v257, 920167782
    %v271 = vsel %vm263, %v254, %v270
    %v272 = vsel %vm262, %v269, %v271
    %v273 = vsel %vm261, %v251, %v254
    %v274 = vsel %vm264, %v260, 1326507024
    %v275 = vsel %vm263, %v257, %v274
    %v276 = vsel %vm262, %v273, %v275
    %v277 = vshll.u32 %v237, 8
    %v278 = vmul.u32.u64.compose %v277, %v276
    %v279 = vextract.low.u32 %v278
    %v280 = vextract.high.u32 %v278
    %v281 = vmul.u32.u64.compose %v277, %v272
    %v282 = vextract.low.u32 %v281
    %v283 = vextract.high.u32 %v281
    %v284 = vmul.u32 %v277, %v268
    %v285 = vadd.s32 %v280, %v282
    %vm286 = vc.u32 %v280, %v282
    %v287 = vadd.s32 %v283, 1
    %v288 = vsel %vm286, %v287, %v283
    %v289 = vadd.s32 %v284, %v288
    %v290 = vadd.s32 %v289, 536870912
    %v291 = vshrl.u32 %v290, 30
    %v292 = vshll.u32 %v291, 30
    %v293 = vsub.s32 %v289, %v292
    %vm294 = vcmp.lt.s32.totalorder %v293, 0
    %v295 = vsub.s32 0, %v293
    %v296 = vsel %vm294, %v295, %v293
    %v297 = vclz %v296
    %v298 = vsub.s32 %v297, 2
    %vm299 = vcmp.gt.s32.totalorder 0, %v298
    %v300 = vsel %vm299, 0, %v298
    %v301 = vsub.s32 32, %v300
    %v302 = vshll.u32 %v293, %v300
    %v303 = vshrl.u32 %v285, %v301
    %v304 = vor.u32 %v302, %v303
    %v305 = vsub.s32 4294967266, %v300
    %v306 = vadd.s32 %v305, 127
    %v307 = vshll.u32 %v306, 23
    %v308 = vor.u32 4788187, %v307
    %v309 = vand.u32 2147483647, %v308
    %v311 = vcvt.s32.f32 %v304
    %v312 = vmul.f32 %v311, %v309
    %v313 = vxor.u32 %v312, 2147483648
    %v314 = vsel %vm231, %v313, %v312
    %v315 = vsub.s32 4, %v291
    %v316 = vsel %vm231, %v315, %v291
    %v317 = vsel %vm230, %v197, %v314
    %v318 = vsel %vm230, 0, %v316
    %v319 = vcosq.f32.pop %v317
    %v320 = vsinq.f32.pop %v317
    %vm321 = vweird.f32 %v197
    %v322 = vadd.s32 %v318, 3
    %v323 = vand.u32 %v322, 3
    %vm324 = vcmp.lt.s32.totalorder %v323, 2
    %vm325 = vcmp.eq.s32.totalorder %v323, 0
    %v326 = vxor.u32 %v320, 2147483648
    %v327 = vsel %vm325, %v319, %v326
    %vm328 = vcmp.eq.s32.totalorder %v323, 2
    %v329 = vxor.u32 %v319, 2147483648
    %v330 = vsel %vm328, %v329, %v320
    %v331 = vsel %vm324, %v327, %v330
    %v332 = vsel %vm321, nan, %v331
    %v333 = vand.u32 2147483647, %v198
    %vm334 = vcmp.le.f32.partialorder %v333, 0.7853982
    %vm335 = vcmp.lt.s32.totalorder %v198, 0
    %v336 = vand.u32 %v198, 2139095040
    %v337 = vshrl.u32 %v336, 23
    %v338 = vsub.s32 %v337, 127
    %v339 = vand.u32 2147483647, %v198
    %v340 = vand.u32 %v339, 8388607
    %v341 = vor.u32 %v340, 8388608
    %v342 = vsub.s32 0, %v341
    %v343 = vadd.s32 %v338, 1
    %vm344 = vcmp.gt.s32.totalorder %v343, 0
    %v345 = vsel %vm344, %v343, 0
    %v346 = vshrl.u32 %v345, 5
    %v347 = vand.u32 %v345, 31
    %v348 = vsub.s32 32, %v347
    %v349 = vshrl.u32 683565275, %v348
    %v350 = vshll.u32 683565275, %v347
    %v351 = vshrl.u32 2475754826, %v348
    %v352 = vor.u32 %v350, %v351
    %v353 = vshll.u32 2475754826, %v347
    %v354 = vshrl.u32 2131351028, %v348
    %v355 = vor.u32 %v353, %v354
    %v356 = vshll.u32 2131351028, %v347
    %v357 = vshrl.u32 2102212464, %v348
    %v358 = vor.u32 %v356, %v357
    %v359 = vshll.u32 2102212464, %v347
    %v360 = vshrl.u32 920167782, %v348
    %v361 = vor.u32 %v359, %v360
    %v362 = vshll.u32 920167782, %v347
    %v363 = vshrl.u32 1326507024, %v348
    %v364 = vor.u32 %v362, %v363
    %vm365 = vcmp.lt.s32.totalorder %v346, 1
    %vm366 = vcmp.lt.s32.totalorder %v346, 2
    %vm367 = vcmp.lt.s32.totalorder %v346, 3
    %vm368 = vcmp.lt.s32.totalorder %v346, 4
    %v369 = vsel %vm365, %v349, %v352
    %v370 = vsel %vm368, %v358, 2102212464
    %v371 = vsel %vm367, %v355, %v370
    %v372 = vsel %vm366, %v369, %v371
    %v373 = vsel %vm365, %v352, %v355
    %v374 = vsel %vm368, %v361, 920167782
    %v375 = vsel %vm367, %v358, %v374
    %v376 = vsel %vm366, %v373, %v375
    %v377 = vsel %vm365, %v355, %v358
    %v378 = vsel %vm368, %v364, 1326507024
    %v379 = vsel %vm367, %v361, %v378
    %v380 = vsel %vm366, %v377, %v379
    %v381 = vshll.u32 %v341, 8
    %v382 = vmul.u32.u64.compose %v381, %v380
    %v383 = vextract.low.u32 %v382
    %v384 = vextract.high.u32 %v382
    %v385 = vmul.u32.u64.compose %v381, %v376
    %v386 = vextract.low.u32 %v385
    %v387 = vextract.high.u32 %v385
    %v388 = vmul.u32 %v381, %v372
    %v389 = vadd.s32 %v384, %v386
    %vm390 = vc.u32 %v384, %v386
    %v391 = vadd.s32 %v387, 1
    %v392 = vsel %vm390, %v391, %v387
    %v393 = vadd.s32 %v388, %v392
    %v394 = vadd.s32 %v393, 536870912
    %v395 = vshrl.u32 %v394, 30
    %v396 = vshll.u32 %v395, 30
    %v397 = vsub.s32 %v393, %v396
    %vm398 = vcmp.lt.s32.totalorder %v397, 0
    %v399 = vsub.s32 0, %v397
    %v400 = vsel %vm398, %v399, %v397
    %v401 = vclz %v400
    %v402 = vsub.s32 %v401, 2
    %vm403 = vcmp.gt.s32.totalorder 0, %v402
    %v404 = vsel %vm403, 0, %v402
    %v405 = vsub.s32 32, %v404
    %v406 = vshll.u32 %v397, %v404
    %v407 = vshrl.u32 %v389, %v405
    %v408 = vor.u32 %v406, %v407
    %v409 = vsub.s32 4294967266, %v404
    %v410 = vadd.s32 %v409, 127
    %v411 = vshll.u32 %v410, 23
    %v412 = vor.u32 4788187, %v411
    %v413 = vand.u32 2147483647, %v412
    %v415 = vcvt.s32.f32 %v408
    %v416 = vmul.f32 %v415, %v413
    %v417 = vxor.u32 %v416, 2147483648
    %v418 = vsel %vm335, %v417, %v416
    %v419 = vsub.s32 4, %v395
    %v420 = vsel %vm335, %v419, %v395
    %v421 = vsel %vm334, %v198, %v418
    %v422 = vsel %vm334, 0, %v420
    %v423 = vcosq.f32.pop %v421
    %v424 = vsinq.f32.pop %v421
    %vm425 = vweird.f32 %v198
    %v426 = vadd.s32 %v422, 3
    %v427 = vand.u32 %v426, 3
    %vm428 = vcmp.lt.s32.totalorder %v427, 2
    %vm429 = vcmp.eq.s32.totalorder %v427, 0
    %v430 = vxor.u32 %v424, 2147483648
    %v431 = vsel %vm429, %v423, %v430
    %vm432 = vcmp.eq.s32.totalorder %v427, 2
    %v433 = vxor.u32 %v423, 2147483648
    %v434 = vsel %vm432, %v433, %v424
    %v435 = vsel %vm428, %v431, %v434
    %v436 = vsel %vm425, nan, %v435
    %v437 = vand.u32 2147483647, %v199
    %vm438 = vcmp.le.f32.partialorder %v437, 0.7853982
    %vm439 = vcmp.lt.s32.totalorder %v199, 0
    %v440 = vand.u32 %v199, 2139095040
    %v441 = vshrl.u32 %v440, 23
    %v442 = vsub.s32 %v441, 127
    %v443 = vand.u32 2147483647, %v199
    %v444 = vand.u32 %v443, 8388607
    %v445 = vor.u32 %v444, 8388608
    %v446 = vsub.s32 0, %v445
    %v447 = vadd.s32 %v442, 1
    %vm448 = vcmp.gt.s32.totalorder %v447, 0
    %v449 = vsel %vm448, %v447, 0
    %v450 = vshrl.u32 %v449, 5
    %v451 = vand.u32 %v449, 31
    %v452 = vsub.s32 32, %v451
    %v453 = vshrl.u32 683565275, %v452
    %v454 = vshll.u32 683565275, %v451
    %v455 = vshrl.u32 2475754826, %v452
    %v456 = vor.u32 %v454, %v455
    %v457 = vshll.u32 2475754826, %v451
    %v458 = vshrl.u32 2131351028, %v452
    %v459 = vor.u32 %v457, %v458
    %v460 = vshll.u32 2131351028, %v451
    %v461 = vshrl.u32 2102212464, %v452
    %v462 = vor.u32 %v460, %v461
    %v463 = vshll.u32 2102212464, %v451
    %v464 = vshrl.u32 920167782, %v452
    %v465 = vor.u32 %v463, %v464
    %v466 = vshll.u32 920167782, %v451
    %v467 = vshrl.u32 1326507024, %v452
    %v468 = vor.u32 %v466, %v467
    %vm469 = vcmp.lt.s32.totalorder %v450, 1
    %vm470 = vcmp.lt.s32.totalorder %v450, 2
    %vm471 = vcmp.lt.s32.totalorder %v450, 3
    %vm472 = vcmp.lt.s32.totalorder %v450, 4
    %v473 = vsel %vm469, %v453, %v456
    %v474 = vsel %vm472, %v462, 2102212464
    %v475 = vsel %vm471, %v459, %v474
    %v476 = vsel %vm470, %v473, %v475
    %v477 = vsel %vm469, %v456, %v459
    %v478 = vsel %vm472, %v465, 920167782
    %v479 = vsel %vm471, %v462, %v478
    %v480 = vsel %vm470, %v477, %v479
    %v481 = vsel %vm469, %v459, %v462
    %v482 = vsel %vm472, %v468, 1326507024
    %v483 = vsel %vm471, %v465, %v482
    %v484 = vsel %vm470, %v481, %v483
    %v485 = vshll.u32 %v445, 8
    %v486 = vmul.u32.u64.compose %v485, %v484
    %v487 = vextract.low.u32 %v486
    %v488 = vextract.high.u32 %v486
    %v489 = vmul.u32.u64.compose %v485, %v480
    %v490 = vextract.low.u32 %v489
    %v491 = vextract.high.u32 %v489
    %v492 = vmul.u32 %v485, %v476
    %v493 = vadd.s32 %v488, %v490
    %vm494 = vc.u32 %v488, %v490
    %v495 = vadd.s32 %v491, 1
    %v496 = vsel %vm494, %v495, %v491
    %v497 = vadd.s32 %v492, %v496
    %v498 = vadd.s32 %v497, 536870912
    %v499 = vshrl.u32 %v498, 30
    %v500 = vshll.u32 %v499, 30
    %v501 = vsub.s32 %v497, %v500
    %vm502 = vcmp.lt.s32.totalorder %v501, 0
    %v503 = vsub.s32 0, %v501
    %v504 = vsel %vm502, %v503, %v501
    %v505 = vclz %v504
    %v506 = vsub.s32 %v505, 2
    %vm507 = vcmp.gt.s32.totalorder 0, %v506
    %v508 = vsel %vm507, 0, %v506
    %v509 = vsub.s32 32, %v508
    %v510 = vshll.u32 %v501, %v508
    %v511 = vshrl.u32 %v493, %v509
    %v512 = vor.u32 %v510, %v511
    %v513 = vsub.s32 4294967266, %v508
    %v514 = vadd.s32 %v513, 127
    %v515 = vshll.u32 %v514, 23
    %v516 = vor.u32 4788187, %v515
    %v517 = vand.u32 2147483647, %v516
    %v519 = vcvt.s32.f32 %v512
    %v520 = vmul.f32 %v519, %v517
    %v521 = vxor.u32 %v520, 2147483648
    %v522 = vsel %vm439, %v521, %v520
    %v523 = vsub.s32 4, %v499
    %v524 = vsel %vm439, %v523, %v499
    %v525 = vsel %vm438, %v199, %v522
    %v526 = vsel %vm438, 0, %v524
    %v527 = vcosq.f32.pop %v525
    %v528 = vsinq.f32.pop %v525
    %vm529 = vweird.f32 %v199
    %v530 = vadd.s32 %v526, 3
    %v531 = vand.u32 %v530, 3
    %vm532 = vcmp.lt.s32.totalorder %v531, 2
    %vm533 = vcmp.eq.s32.totalorder %v531, 0
    %v534 = vxor.u32 %v528, 2147483648
    %v535 = vsel %vm533, %v527, %v534
    %vm536 = vcmp.eq.s32.totalorder %v531, 2
    %v537 = vxor.u32 %v527, 2147483648
    %v538 = vsel %vm536, %v537, %v528
    %v539 = vsel %vm532, %v535, %v538
    %v540 = vsel %vm529, nan, %v539
    %v541 = vand.u32 2147483647, %v200
    %vm542 = vcmp.le.f32.partialorder %v541, 0.7853982
    %vm543 = vcmp.lt.s32.totalorder %v200, 0
    %v544 = vand.u32 %v200, 2139095040
    %v545 = vshrl.u32 %v544, 23
    %v546 = vsub.s32 %v545, 127
    %v547 = vand.u32 2147483647, %v200
    %v548 = vand.u32 %v547, 8388607
    %v549 = vor.u32 %v548, 8388608
    %v550 = vsub.s32 0, %v549
    %v551 = vadd.s32 %v546, 1
    %vm552 = vcmp.gt.s32.totalorder %v551, 0
    %v553 = vsel %vm552, %v551, 0
    %v554 = vshrl.u32 %v553, 5
    %v555 = vand.u32 %v553, 31
    %v556 = vsub.s32 32, %v555
    %v557 = vshrl.u32 683565275, %v556
    %v558 = vshll.u32 683565275, %v555
    %v559 = vshrl.u32 2475754826, %v556
    %v560 = vor.u32 %v558, %v559
    %v561 = vshll.u32 2475754826, %v555
    %v562 = vshrl.u32 2131351028, %v556
    %v563 = vor.u32 %v561, %v562
    %v564 = vshll.u32 2131351028, %v555
    %v565 = vshrl.u32 2102212464, %v556
    %v566 = vor.u32 %v564, %v565
    %v567 = vshll.u32 2102212464, %v555
    %v568 = vshrl.u32 920167782, %v556
    %v569 = vor.u32 %v567, %v568
    %v570 = vshll.u32 920167782, %v555
    %v571 = vshrl.u32 1326507024, %v556
    %v572 = vor.u32 %v570, %v571
    %vm573 = vcmp.lt.s32.totalorder %v554, 1
    %vm574 = vcmp.lt.s32.totalorder %v554, 2
    %vm575 = vcmp.lt.s32.totalorder %v554, 3
    %vm576 = vcmp.lt.s32.totalorder %v554, 4
    %v577 = vsel %vm573, %v557, %v560
    %v578 = vsel %vm576, %v566, 2102212464
    %v579 = vsel %vm575, %v563, %v578
    %v580 = vsel %vm574, %v577, %v579
    %v581 = vsel %vm573, %v560, %v563
    %v582 = vsel %vm576, %v569, 920167782
    %v583 = vsel %vm575, %v566, %v582
    %v584 = vsel %vm574, %v581, %v583
    %v585 = vsel %vm573, %v563, %v566
    %v586 = vsel %vm576, %v572, 1326507024
    %v587 = vsel %vm575, %v569, %v586
    %v588 = vsel %vm574, %v585, %v587
    %v589 = vshll.u32 %v549, 8
    %v590 = vmul.u32.u64.compose %v589, %v588
    %v591 = vextract.low.u32 %v590
    %v592 = vextract.high.u32 %v590
    %v593 = vmul.u32.u64.compose %v589, %v584
    %v594 = vextract.low.u32 %v593
    %v595 = vextract.high.u32 %v593
    %v596 = vmul.u32 %v589, %v580
    %v597 = vadd.s32 %v592, %v594
    %vm598 = vc.u32 %v592, %v594
    %v599 = vadd.s32 %v595, 1
    %v600 = vsel %vm598, %v599, %v595
    %v601 = vadd.s32 %v596, %v600
    %v602 = vadd.s32 %v601, 536870912
    %v603 = vshrl.u32 %v602, 30
    %v604 = vshll.u32 %v603, 30
    %v605 = vsub.s32 %v601, %v604
    %vm606 = vcmp.lt.s32.totalorder %v605, 0
    %v607 = vsub.s32 0, %v605
    %v608 = vsel %vm606, %v607, %v605
    %v609 = vclz %v608
    %v610 = vsub.s32 %v609, 2
    %vm611 = vcmp.gt.s32.totalorder 0, %v610
    %v612 = vsel %vm611, 0, %v610
    %v613 = vsub.s32 32, %v612
    %v614 = vshll.u32 %v605, %v612
    %v615 = vshrl.u32 %v597, %v613
    %v616 = vor.u32 %v614, %v615
    %v617 = vsub.s32 4294967266, %v612
    %v618 = vadd.s32 %v617, 127
    %v619 = vshll.u32 %v618, 23
    %v620 = vor.u32 4788187, %v619
    %v621 = vand.u32 2147483647, %v620
    %v623 = vcvt.s32.f32 %v616
    %v624 = vmul.f32 %v623, %v621
    %v625 = vxor.u32 %v624, 2147483648
    %v626 = vsel %vm543, %v625, %v624
    %v627 = vsub.s32 4, %v603
    %v628 = vsel %vm543, %v627, %v603
    %v629 = vsel %vm542, %v200, %v626
    %v630 = vsel %vm542, 0, %v628
    %v631 = vcosq.f32.pop %v629
    %v632 = vsinq.f32.pop %v629
    %vm633 = vweird.f32 %v200
    %v634 = vadd.s32 %v630, 3
    %v635 = vand.u32 %v634, 3
    %vm636 = vcmp.lt.s32.totalorder %v635, 2
    %vm637 = vcmp.eq.s32.totalorder %v635, 0
    %v638 = vxor.u32 %v632, 2147483648
    %v639 = vsel %vm637, %v631, %v638
    %vm640 = vcmp.eq.s32.totalorder %v635, 2
    %v641 = vxor.u32 %v631, 2147483648
    %v642 = vsel %vm640, %v641, %v632
    %v643 = vsel %vm636, %v639, %v642
    %v644 = vsel %vm633, nan, %v643
    %v645 = vand.u32 2147483647, %v201
    %vm646 = vcmp.le.f32.partialorder %v645, 0.7853982
    %vm647 = vcmp.lt.s32.totalorder %v201, 0
    %v648 = vand.u32 %v201, 2139095040
    %v649 = vshrl.u32 %v648, 23
    %v650 = vsub.s32 %v649, 127
    %v651 = vand.u32 2147483647, %v201
    %v652 = vand.u32 %v651, 8388607
    %v653 = vor.u32 %v652, 8388608
    %v654 = vsub.s32 0, %v653
    %v655 = vadd.s32 %v650, 1
    %vm656 = vcmp.gt.s32.totalorder %v655, 0
    %v657 = vsel %vm656, %v655, 0
    %v658 = vshrl.u32 %v657, 5
    %v659 = vand.u32 %v657, 31
    %v660 = vsub.s32 32, %v659
    %v661 = vshrl.u32 683565275, %v660
    %v662 = vshll.u32 683565275, %v659
    %v663 = vshrl.u32 2475754826, %v660
    %v664 = vor.u32 %v662, %v663
    %v665 = vshll.u32 2475754826, %v659
    %v666 = vshrl.u32 2131351028, %v660
    %v667 = vor.u32 %v665, %v666
    %v668 = vshll.u32 2131351028, %v659
    %v669 = vshrl.u32 2102212464, %v660
    %v670 = vor.u32 %v668, %v669
    %v671 = vshll.u32 2102212464, %v659
    %v672 = vshrl.u32 920167782, %v660
    %v673 = vor.u32 %v671, %v672
    %v674 = vshll.u32 920167782, %v659
    %v675 = vshrl.u32 1326507024, %v660
    %v676 = vor.u32 %v674, %v675
    %vm677 = vcmp.lt.s32.totalorder %v658, 1
    %vm678 = vcmp.lt.s32.totalorder %v658, 2
    %vm679 = vcmp.lt.s32.totalorder %v658, 3
    %vm680 = vcmp.lt.s32.totalorder %v658, 4
    %v681 = vsel %vm677, %v661, %v664
    %v682 = vsel %vm680, %v670, 2102212464
    %v683 = vsel %vm679, %v667, %v682
    %v684 = vsel %vm678, %v681, %v683
    %v685 = vsel %vm677, %v664, %v667
    %v686 = vsel %vm680, %v673, 920167782
    %v687 = vsel %vm679, %v670, %v686
    %v688 = vsel %vm678, %v685, %v687
    %v689 = vsel %vm677, %v667, %v670
    %v690 = vsel %vm680, %v676, 1326507024
    %v691 = vsel %vm679, %v673, %v690
    %v692 = vsel %vm678, %v689, %v691
    %v693 = vshll.u32 %v653, 8
    %v694 = vmul.u32.u64.compose %v693, %v692
    %v695 = vextract.low.u32 %v694
    %v696 = vextract.high.u32 %v694
    %v697 = vmul.u32.u64.compose %v693, %v688
    %v698 = vextract.low.u32 %v697
    %v699 = vextract.high.u32 %v697
    %v700 = vmul.u32 %v693, %v684
    %v701 = vadd.s32 %v696, %v698
    %vm702 = vc.u32 %v696, %v698
    %v703 = vadd.s32 %v699, 1
    %v704 = vsel %vm702, %v703, %v699
    %v705 = vadd.s32 %v700, %v704
    %v706 = vadd.s32 %v705, 536870912
    %v707 = vshrl.u32 %v706, 30
    %v708 = vshll.u32 %v707, 30
    %v709 = vsub.s32 %v705, %v708
    %vm710 = vcmp.lt.s32.totalorder %v709, 0
    %v711 = vsub.s32 0, %v709
    %v712 = vsel %vm710, %v711, %v709
    %v713 = vclz %v712
    %v714 = vsub.s32 %v713, 2
    %vm715 = vcmp.gt.s32.totalorder 0, %v714
    %v716 = vsel %vm715, 0, %v714
    %v717 = vsub.s32 32, %v716
    %v718 = vshll.u32 %v709, %v716
    %v719 = vshrl.u32 %v701, %v717
    %v720 = vor.u32 %v718, %v719
    %v721 = vsub.s32 4294967266, %v716
    %v722 = vadd.s32 %v721, 127
    %v723 = vshll.u32 %v722, 23
    %v724 = vor.u32 4788187, %v723
    %v725 = vand.u32 2147483647, %v724
    %v727 = vcvt.s32.f32 %v720
    %v728 = vmul.f32 %v727, %v725
    %v729 = vxor.u32 %v728, 2147483648
    %v730 = vsel %vm647, %v729, %v728
    %v731 = vsub.s32 4, %v707
    %v732 = vsel %vm647, %v731, %v707
    %v733 = vsel %vm646, %v201, %v730
    %v734 = vsel %vm646, 0, %v732
    %v735 = vcosq.f32.pop %v733
    %v736 = vsinq.f32.pop %v733
    %vm737 = vweird.f32 %v201
    %v738 = vadd.s32 %v734, 3
    %v739 = vand.u32 %v738, 3
    %vm740 = vcmp.lt.s32.totalorder %v739, 2
    %vm741 = vcmp.eq.s32.totalorder %v739, 0
    %v742 = vxor.u32 %v736, 2147483648
    %v743 = vsel %vm741, %v735, %v742
    %vm744 = vcmp.eq.s32.totalorder %v739, 2
    %v745 = vxor.u32 %v735, 2147483648
    %v746 = vsel %vm744, %v745, %v736
    %v747 = vsel %vm740, %v743, %v746
    %v748 = vsel %vm737, nan, %v747
    %v749 = vand.u32 2147483647, %v202
    %vm750 = vcmp.le.f32.partialorder %v749, 0.7853982
    %vm751 = vcmp.lt.s32.totalorder %v202, 0
    %v752 = vand.u32 %v202, 2139095040
    %v753 = vshrl.u32 %v752, 23
    %v754 = vsub.s32 %v753, 127
    %v755 = vand.u32 2147483647, %v202
    %v756 = vand.u32 %v755, 8388607
    %v757 = vor.u32 %v756, 8388608
    %v758 = vsub.s32 0, %v757
    %v759 = vadd.s32 %v754, 1
    %vm760 = vcmp.gt.s32.totalorder %v759, 0
    %v761 = vsel %vm760, %v759, 0
    %v762 = vshrl.u32 %v761, 5
    %v763 = vand.u32 %v761, 31
    %v764 = vsub.s32 32, %v763
    %v765 = vshrl.u32 683565275, %v764
    %v766 = vshll.u32 683565275, %v763
    %v767 = vshrl.u32 2475754826, %v764
    %v768 = vor.u32 %v766, %v767
    %v769 = vshll.u32 2475754826, %v763
    %v770 = vshrl.u32 2131351028, %v764
    %v771 = vor.u32 %v769, %v770
    %v772 = vshll.u32 2131351028, %v763
    %v773 = vshrl.u32 2102212464, %v764
    %v774 = vor.u32 %v772, %v773
    %v775 = vshll.u32 2102212464, %v763
    %v776 = vshrl.u32 920167782, %v764
    %v777 = vor.u32 %v775, %v776
    %v778 = vshll.u32 920167782, %v763
    %v779 = vshrl.u32 1326507024, %v764
    %v780 = vor.u32 %v778, %v779
    %vm781 = vcmp.lt.s32.totalorder %v762, 1
    %vm782 = vcmp.lt.s32.totalorder %v762, 2
    %vm783 = vcmp.lt.s32.totalorder %v762, 3
    %vm784 = vcmp.lt.s32.totalorder %v762, 4
    %v785 = vsel %vm781, %v765, %v768
    %v786 = vsel %vm784, %v774, 2102212464
    %v787 = vsel %vm783, %v771, %v786
    %v788 = vsel %vm782, %v785, %v787
    %v789 = vsel %vm781, %v768, %v771
    %v790 = vsel %vm784, %v777, 920167782
    %v791 = vsel %vm783, %v774, %v790
    %v792 = vsel %vm782, %v789, %v791
    %v793 = vsel %vm781, %v771, %v774
    %v794 = vsel %vm784, %v780, 1326507024
    %v795 = vsel %vm783, %v777, %v794
    %v796 = vsel %vm782, %v793, %v795
    %v797 = vshll.u32 %v757, 8
    %v798 = vmul.u32.u64.compose %v797, %v796
    %v799 = vextract.low.u32 %v798
    %v800 = vextract.high.u32 %v798
    %v801 = vmul.u32.u64.compose %v797, %v792
    %v802 = vextract.low.u32 %v801
    %v803 = vextract.high.u32 %v801
    %v804 = vmul.u32 %v797, %v788
    %v805 = vadd.s32 %v800, %v802
    %vm806 = vc.u32 %v800, %v802
    %v807 = vadd.s32 %v803, 1
    %v808 = vsel %vm806, %v807, %v803
    %v809 = vadd.s32 %v804, %v808
    %v810 = vadd.s32 %v809, 536870912
    %v811 = vshrl.u32 %v810, 30
    %v812 = vshll.u32 %v811, 30
    %v813 = vsub.s32 %v809, %v812
    %vm814 = vcmp.lt.s32.totalorder %v813, 0
    %v815 = vsub.s32 0, %v813
    %v816 = vsel %vm814, %v815, %v813
    %v817 = vclz %v816
    %v818 = vsub.s32 %v817, 2
    %vm819 = vcmp.gt.s32.totalorder 0, %v818
    %v820 = vsel %vm819, 0, %v818
    %v821 = vsub.s32 32, %v820
    %v822 = vshll.u32 %v813, %v820
    %v823 = vshrl.u32 %v805, %v821
    %v824 = vor.u32 %v822, %v823
    %v825 = vsub.s32 4294967266, %v820
    %v826 = vadd.s32 %v825, 127
    %v827 = vshll.u32 %v826, 23
    %v828 = vor.u32 4788187, %v827
    %v829 = vand.u32 2147483647, %v828
    %v831 = vcvt.s32.f32 %v824
    %v832 = vmul.f32 %v831, %v829
    %v833 = vxor.u32 %v832, 2147483648
    %v834 = vsel %vm751, %v833, %v832
    %v835 = vsub.s32 4, %v811
    %v836 = vsel %vm751, %v835, %v811
    %v837 = vsel %vm750, %v202, %v834
    %v838 = vsel %vm750, 0, %v836
    %v839 = vcosq.f32.pop %v837
    %v840 = vsinq.f32.pop %v837
    %vm841 = vweird.f32 %v202
    %v842 = vadd.s32 %v838, 3
    %v843 = vand.u32 %v842, 3
    %vm844 = vcmp.lt.s32.totalorder %v843, 2
    %vm845 = vcmp.eq.s32.totalorder %v843, 0
    %v846 = vxor.u32 %v840, 2147483648
    %v847 = vsel %vm845, %v839, %v846
    %vm848 = vcmp.eq.s32.totalorder %v843, 2
    %v849 = vxor.u32 %v839, 2147483648
    %v850 = vsel %vm848, %v849, %v840
    %v851 = vsel %vm844, %v847, %v850
    %v852 = vsel %vm841, nan, %v851
    %v853 = vand.u32 2147483647, %v203
    %vm854 = vcmp.le.f32.partialorder %v853, 0.7853982
    %vm855 = vcmp.lt.s32.totalorder %v203, 0
    %v856 = vand.u32 %v203, 2139095040
    %v857 = vshrl.u32 %v856, 23
    %v858 = vsub.s32 %v857, 127
    %v859 = vand.u32 2147483647, %v203
    %v860 = vand.u32 %v859, 8388607
    %v861 = vor.u32 %v860, 8388608
    %v862 = vsub.s32 0, %v861
    %v863 = vadd.s32 %v858, 1
    %vm864 = vcmp.gt.s32.totalorder %v863, 0
    %v865 = vsel %vm864, %v863, 0
    %v866 = vshrl.u32 %v865, 5
    %v867 = vand.u32 %v865, 31
    %v868 = vsub.s32 32, %v867
    %v869 = vshrl.u32 683565275, %v868
    %v870 = vshll.u32 683565275, %v867
    %v871 = vshrl.u32 2475754826, %v868
    %v872 = vor.u32 %v870, %v871
    %v873 = vshll.u32 2475754826, %v867
    %v874 = vshrl.u32 2131351028, %v868
    %v875 = vor.u32 %v873, %v874
    %v876 = vshll.u32 2131351028, %v867
    %v877 = vshrl.u32 2102212464, %v868
    %v878 = vor.u32 %v876, %v877
    %v879 = vshll.u32 2102212464, %v867
    %v880 = vshrl.u32 920167782, %v868
    %v881 = vor.u32 %v879, %v880
    %v882 = vshll.u32 920167782, %v867
    %v883 = vshrl.u32 1326507024, %v868
    %v884 = vor.u32 %v882, %v883
    %vm885 = vcmp.lt.s32.totalorder %v866, 1
    %vm886 = vcmp.lt.s32.totalorder %v866, 2
    %vm887 = vcmp.lt.s32.totalorder %v866, 3
    %vm888 = vcmp.lt.s32.totalorder %v866, 4
    %v889 = vsel %vm885, %v869, %v872
    %v890 = vsel %vm888, %v878, 2102212464
    %v891 = vsel %vm887, %v875, %v890
    %v892 = vsel %vm886, %v889, %v891
    %v893 = vsel %vm885, %v872, %v875
    %v894 = vsel %vm888, %v881, 920167782
    %v895 = vsel %vm887, %v878, %v894
    %v896 = vsel %vm886, %v893, %v895
    %v897 = vsel %vm885, %v875, %v878
    %v898 = vsel %vm888, %v884, 1326507024
    %v899 = vsel %vm887, %v881, %v898
    %v900 = vsel %vm886, %v897, %v899
    %v901 = vshll.u32 %v861, 8
    %v902 = vmul.u32.u64.compose %v901, %v900
    %v903 = vextract.low.u32 %v902
    %v904 = vextract.high.u32 %v902
    %v905 = vmul.u32.u64.compose %v901, %v896
    %v906 = vextract.low.u32 %v905
    %v907 = vextract.high.u32 %v905
    %v908 = vmul.u32 %v901, %v892
    %v909 = vadd.s32 %v904, %v906
    %vm910 = vc.u32 %v904, %v906
    %v911 = vadd.s32 %v907, 1
    %v912 = vsel %vm910, %v911, %v907
    %v913 = vadd.s32 %v908, %v912
    %v914 = vadd.s32 %v913, 536870912
    %v915 = vshrl.u32 %v914, 30
    %v916 = vshll.u32 %v915, 30
    %v917 = vsub.s32 %v913, %v916
    %vm918 = vcmp.lt.s32.totalorder %v917, 0
    %v919 = vsub.s32 0, %v917
    %v920 = vsel %vm918, %v919, %v917
    %v921 = vclz %v920
    %v922 = vsub.s32 %v921, 2
    %vm923 = vcmp.gt.s32.totalorder 0, %v922
    %v924 = vsel %vm923, 0, %v922
    %v925 = vsub.s32 32, %v924
    %v926 = vshll.u32 %v917, %v924
    %v927 = vshrl.u32 %v909, %v925
    %v928 = vor.u32 %v926, %v927
    %v929 = vsub.s32 4294967266, %v924
    %v930 = vadd.s32 %v929, 127
    %v931 = vshll.u32 %v930, 23
    %v932 = vor.u32 4788187, %v931
    %v933 = vand.u32 2147483647, %v932
    %v935 = vcvt.s32.f32 %v928
    %v936 = vmul.f32 %v935, %v933
    %v937 = vxor.u32 %v936, 2147483648
    %v938 = vsel %vm855, %v937, %v936
    %v939 = vsub.s32 4, %v915
    %v940 = vsel %vm855, %v939, %v915
    %v941 = vsel %vm854, %v203, %v938
    %v942 = vsel %vm854, 0, %v940
    %v943 = vcosq.f32.pop %v941
    %v944 = vsinq.f32.pop %v941
    %vm945 = vweird.f32 %v203
    %v946 = vadd.s32 %v942, 3
    %v947 = vand.u32 %v946, 3
    %vm948 = vcmp.lt.s32.totalorder %v947, 2
    %vm949 = vcmp.eq.s32.totalorder %v947, 0
    %v950 = vxor.u32 %v944, 2147483648
    %v951 = vsel %vm949, %v943, %v950
    %vm952 = vcmp.eq.s32.totalorder %v947, 2
    %v953 = vxor.u32 %v943, 2147483648
    %v954 = vsel %vm952, %v953, %v944
    %v955 = vsel %vm948, %v951, %v954
    %v956 = vsel %vm945, nan, %v955
    %v957 = vand.u32 2147483647, %v204
    %vm958 = vcmp.le.f32.partialorder %v957, 0.7853982
    %vm959 = vcmp.lt.s32.totalorder %v204, 0
    %v960 = vand.u32 %v204, 2139095040
    %v961 = vshrl.u32 %v960, 23
    %v962 = vsub.s32 %v961, 127
    %v963 = vand.u32 2147483647, %v204
    %v964 = vand.u32 %v963, 8388607
    %v965 = vor.u32 %v964, 8388608
    %v966 = vsub.s32 0, %v965
    %v967 = vadd.s32 %v962, 1
    %vm968 = vcmp.gt.s32.totalorder %v967, 0
    %v969 = vsel %vm968, %v967, 0
    %v970 = vshrl.u32 %v969, 5
    %v971 = vand.u32 %v969, 31
    %v972 = vsub.s32 32, %v971
    %v973 = vshrl.u32 683565275, %v972
    %v974 = vshll.u32 683565275, %v971
    %v975 = vshrl.u32 2475754826, %v972
    %v976 = vor.u32 %v974, %v975
    %v977 = vshll.u32 2475754826, %v971
    %v978 = vshrl.u32 2131351028, %v972
    %v979 = vor.u32 %v977, %v978
    %v980 = vshll.u32 2131351028, %v971
    %v981 = vshrl.u32 2102212464, %v972
    %v982 = vor.u32 %v980, %v981
    %v983 = vshll.u32 2102212464, %v971
    %v984 = vshrl.u32 920167782, %v972
    %v985 = vor.u32 %v983, %v984
    %v986 = vshll.u32 920167782, %v971
    %v987 = vshrl.u32 1326507024, %v972
    %v988 = vor.u32 %v986, %v987
    %vm989 = vcmp.lt.s32.totalorder %v970, 1
    %vm990 = vcmp.lt.s32.totalorder %v970, 2
    %vm991 = vcmp.lt.s32.totalorder %v970, 3
    %vm992 = vcmp.lt.s32.totalorder %v970, 4
    %v993 = vsel %vm989, %v973, %v976
    %v994 = vsel %vm992, %v982, 2102212464
    %v995 = vsel %vm991, %v979, %v994
    %v996 = vsel %vm990, %v993, %v995
    %v997 = vsel %vm989, %v976, %v979
    %v998 = vsel %vm992, %v985, 920167782
    %v999 = vsel %vm991, %v982, %v998
    %v1000 = vsel %vm990, %v997, %v999
    %v1001 = vsel %vm989, %v979, %v982
    %v1002 = vsel %vm992, %v988, 1326507024
    %v1003 = vsel %vm991, %v985, %v1002
    %v1004 = vsel %vm990, %v1001, %v1003
    %v1005 = vshll.u32 %v965, 8
    %v1006 = vmul.u32.u64.compose %v1005, %v1004
    %v1007 = vextract.low.u32 %v1006
    %v1008 = vextract.high.u32 %v1006
    %v1009 = vmul.u32.u64.compose %v1005, %v1000
    %v1010 = vextract.low.u32 %v1009
    %v1011 = vextract.high.u32 %v1009
    %v1012 = vmul.u32 %v1005, %v996
    %v1013 = vadd.s32 %v1008, %v1010
    %vm1014 = vc.u32 %v1008, %v1010
    %v1015 = vadd.s32 %v1011, 1
    %v1016 = vsel %vm1014, %v1015, %v1011
    %v1017 = vadd.s32 %v1012, %v1016
    %v1018 = vadd.s32 %v1017, 536870912
    %v1019 = vshrl.u32 %v1018, 30
    %v1020 = vshll.u32 %v1019, 30
    %v1021 = vsub.s32 %v1017, %v1020
    %vm1022 = vcmp.lt.s32.totalorder %v1021, 0
    %v1023 = vsub.s32 0, %v1021
    %v1024 = vsel %vm1022, %v1023, %v1021
    %v1025 = vclz %v1024
    %v1026 = vsub.s32 %v1025, 2
    %vm1027 = vcmp.gt.s32.totalorder 0, %v1026
    %v1028 = vsel %vm1027, 0, %v1026
    %v1029 = vsub.s32 32, %v1028
    %v1030 = vshll.u32 %v1021, %v1028
    %v1031 = vshrl.u32 %v1013, %v1029
    %v1032 = vor.u32 %v1030, %v1031
    %v1033 = vsub.s32 4294967266, %v1028
    %v1034 = vadd.s32 %v1033, 127
    %v1035 = vshll.u32 %v1034, 23
    %v1036 = vor.u32 4788187, %v1035
    %v1037 = vand.u32 2147483647, %v1036
    %v1039 = vcvt.s32.f32 %v1032
    %v1040 = vmul.f32 %v1039, %v1037
    %v1041 = vxor.u32 %v1040, 2147483648
    %v1042 = vsel %vm959, %v1041, %v1040
    %v1043 = vsub.s32 4, %v1019
    %v1044 = vsel %vm959, %v1043, %v1019
    %v1045 = vsel %vm958, %v204, %v1042
    %v1046 = vsel %vm958, 0, %v1044
    %v1047 = vcosq.f32.pop %v1045
    %v1048 = vsinq.f32.pop %v1045
    %vm1049 = vweird.f32 %v204
    %v1050 = vadd.s32 %v1046, 3
    %v1051 = vand.u32 %v1050, 3
    %vm1052 = vcmp.lt.s32.totalorder %v1051, 2
    %vm1053 = vcmp.eq.s32.totalorder %v1051, 0
    %v1054 = vxor.u32 %v1048, 2147483648
    %v1055 = vsel %vm1053, %v1047, %v1054
    %vm1056 = vcmp.eq.s32.totalorder %v1051, 2
    %v1057 = vxor.u32 %v1047, 2147483648
    %v1058 = vsel %vm1056, %v1057, %v1048
    %v1059 = vsel %vm1052, %v1055, %v1058
    %v1060 = vsel %vm1049, nan, %v1059
    %v1061 = vand.u32 2147483647, %v205
    %vm1062 = vcmp.le.f32.partialorder %v1061, 0.7853982
    %vm1063 = vcmp.lt.s32.totalorder %v205, 0
    %v1064 = vand.u32 %v205, 2139095040
    %v1065 = vshrl.u32 %v1064, 23
    %v1066 = vsub.s32 %v1065, 127
    %v1067 = vand.u32 2147483647, %v205
    %v1068 = vand.u32 %v1067, 8388607
    %v1069 = vor.u32 %v1068, 8388608
    %v1070 = vsub.s32 0, %v1069
    %v1071 = vadd.s32 %v1066, 1
    %vm1072 = vcmp.gt.s32.totalorder %v1071, 0
    %v1073 = vsel %vm1072, %v1071, 0
    %v1074 = vshrl.u32 %v1073, 5
    %v1075 = vand.u32 %v1073, 31
    %v1076 = vsub.s32 32, %v1075
    %v1077 = vshrl.u32 683565275, %v1076
    %v1078 = vshll.u32 683565275, %v1075
    %v1079 = vshrl.u32 2475754826, %v1076
    %v1080 = vor.u32 %v1078, %v1079
    %v1081 = vshll.u32 2475754826, %v1075
    %v1082 = vshrl.u32 2131351028, %v1076
    %v1083 = vor.u32 %v1081, %v1082
    %v1084 = vshll.u32 2131351028, %v1075
    %v1085 = vshrl.u32 2102212464, %v1076
    %v1086 = vor.u32 %v1084, %v1085
    %v1087 = vshll.u32 2102212464, %v1075
    %v1088 = vshrl.u32 920167782, %v1076
    %v1089 = vor.u32 %v1087, %v1088
    %v1090 = vshll.u32 920167782, %v1075
    %v1091 = vshrl.u32 1326507024, %v1076
    %v1092 = vor.u32 %v1090, %v1091
    %vm1093 = vcmp.lt.s32.totalorder %v1074, 1
    %vm1094 = vcmp.lt.s32.totalorder %v1074, 2
    %vm1095 = vcmp.lt.s32.totalorder %v1074, 3
    %vm1096 = vcmp.lt.s32.totalorder %v1074, 4
    %v1097 = vsel %vm1093, %v1077, %v1080
    %v1098 = vsel %vm1096, %v1086, 2102212464
    %v1099 = vsel %vm1095, %v1083, %v1098
    %v1100 = vsel %vm1094, %v1097, %v1099
    %v1101 = vsel %vm1093, %v1080, %v1083
    %v1102 = vsel %vm1096, %v1089, 920167782
    %v1103 = vsel %vm1095, %v1086, %v1102
    %v1104 = vsel %vm1094, %v1101, %v1103
    %v1105 = vsel %vm1093, %v1083, %v1086
    %v1106 = vsel %vm1096, %v1092, 1326507024
    %v1107 = vsel %vm1095, %v1089, %v1106
    %v1108 = vsel %vm1094, %v1105, %v1107
    %v1109 = vshll.u32 %v1069, 8
    %v1110 = vmul.u32.u64.compose %v1109, %v1108
    %v1111 = vextract.low.u32 %v1110
    %v1112 = vextract.high.u32 %v1110
    %v1113 = vmul.u32.u64.compose %v1109, %v1104
    %v1114 = vextract.low.u32 %v1113
    %v1115 = vextract.high.u32 %v1113
    %v1116 = vmul.u32 %v1109, %v1100
    %v1117 = vadd.s32 %v1112, %v1114
    %vm1118 = vc.u32 %v1112, %v1114
    %v1119 = vadd.s32 %v1115, 1
    %v1120 = vsel %vm1118, %v1119, %v1115
    %v1121 = vadd.s32 %v1116, %v1120
    %v1122 = vadd.s32 %v1121, 536870912
    %v1123 = vshrl.u32 %v1122, 30
    %v1124 = vshll.u32 %v1123, 30
    %v1125 = vsub.s32 %v1121, %v1124
    %vm1126 = vcmp.lt.s32.totalorder %v1125, 0
    %v1127 = vsub.s32 0, %v1125
    %v1128 = vsel %vm1126, %v1127, %v1125
    %v1129 = vclz %v1128
    %v1130 = vsub.s32 %v1129, 2
    %vm1131 = vcmp.gt.s32.totalorder 0, %v1130
    %v1132 = vsel %vm1131, 0, %v1130
    %v1133 = vsub.s32 32, %v1132
    %v1134 = vshll.u32 %v1125, %v1132
    %v1135 = vshrl.u32 %v1117, %v1133
    %v1136 = vor.u32 %v1134, %v1135
    %v1137 = vsub.s32 4294967266, %v1132
    %v1138 = vadd.s32 %v1137, 127
    %v1139 = vshll.u32 %v1138, 23
    %v1140 = vor.u32 4788187, %v1139
    %v1141 = vand.u32 2147483647, %v1140
    %v1143 = vcvt.s32.f32 %v1136
    %v1144 = vmul.f32 %v1143, %v1141
    %v1145 = vxor.u32 %v1144, 2147483648
    %v1146 = vsel %vm1063, %v1145, %v1144
    %v1147 = vsub.s32 4, %v1123
    %v1148 = vsel %vm1063, %v1147, %v1123
    %v1149 = vsel %vm1062, %v205, %v1146
    %v1150 = vsel %vm1062, 0, %v1148
    %v1151 = vcosq.f32.pop %v1149
    %v1152 = vsinq.f32.pop %v1149
    %vm1153 = vweird.f32 %v205
    %v1154 = vadd.s32 %v1150, 3
    %v1155 = vand.u32 %v1154, 3
    %vm1156 = vcmp.lt.s32.totalorder %v1155, 2
    %vm1157 = vcmp.eq.s32.totalorder %v1155, 0
    %v1158 = vxor.u32 %v1152, 2147483648
    %v1159 = vsel %vm1157, %v1151, %v1158
    %vm1160 = vcmp.eq.s32.totalorder %v1155, 2
    %v1161 = vxor.u32 %v1151, 2147483648
    %v1162 = vsel %vm1160, %v1161, %v1152
    %v1163 = vsel %vm1156, %v1159, %v1162
    %v1164 = vsel %vm1153, nan, %v1163
    %v1165 = vand.u32 2147483647, %v206
    %vm1166 = vcmp.le.f32.partialorder %v1165, 0.7853982
    %vm1167 = vcmp.lt.s32.totalorder %v206, 0
    %v1168 = vand.u32 %v206, 2139095040
    %v1169 = vshrl.u32 %v1168, 23
    %v1170 = vsub.s32 %v1169, 127
    %v1171 = vand.u32 2147483647, %v206
    %v1172 = vand.u32 %v1171, 8388607
    %v1173 = vor.u32 %v1172, 8388608
    %v1174 = vsub.s32 0, %v1173
    %v1175 = vadd.s32 %v1170, 1
    %vm1176 = vcmp.gt.s32.totalorder %v1175, 0
    %v1177 = vsel %vm1176, %v1175, 0
    %v1178 = vshrl.u32 %v1177, 5
    %v1179 = vand.u32 %v1177, 31
    %v1180 = vsub.s32 32, %v1179
    %v1181 = vshrl.u32 683565275, %v1180
    %v1182 = vshll.u32 683565275, %v1179
    %v1183 = vshrl.u32 2475754826, %v1180
    %v1184 = vor.u32 %v1182, %v1183
    %v1185 = vshll.u32 2475754826, %v1179
    %v1186 = vshrl.u32 2131351028, %v1180
    %v1187 = vor.u32 %v1185, %v1186
    %v1188 = vshll.u32 2131351028, %v1179
    %v1189 = vshrl.u32 2102212464, %v1180
    %v1190 = vor.u32 %v1188, %v1189
    %v1191 = vshll.u32 2102212464, %v1179
    %v1192 = vshrl.u32 920167782, %v1180
    %v1193 = vor.u32 %v1191, %v1192
    %v1194 = vshll.u32 920167782, %v1179
    %v1195 = vshrl.u32 1326507024, %v1180
    %v1196 = vor.u32 %v1194, %v1195
    %vm1197 = vcmp.lt.s32.totalorder %v1178, 1
    %vm1198 = vcmp.lt.s32.totalorder %v1178, 2
    %vm1199 = vcmp.lt.s32.totalorder %v1178, 3
    %vm1200 = vcmp.lt.s32.totalorder %v1178, 4
    %v1201 = vsel %vm1197, %v1181, %v1184
    %v1202 = vsel %vm1200, %v1190, 2102212464
    %v1203 = vsel %vm1199, %v1187, %v1202
    %v1204 = vsel %vm1198, %v1201, %v1203
    %v1205 = vsel %vm1197, %v1184, %v1187
    %v1206 = vsel %vm1200, %v1193, 920167782
    %v1207 = vsel %vm1199, %v1190, %v1206
    %v1208 = vsel %vm1198, %v1205, %v1207
    %v1209 = vsel %vm1197, %v1187, %v1190
    %v1210 = vsel %vm1200, %v1196, 1326507024
    %v1211 = vsel %vm1199, %v1193, %v1210
    %v1212 = vsel %vm1198, %v1209, %v1211
    %v1213 = vshll.u32 %v1173, 8
    %v1214 = vmul.u32.u64.compose %v1213, %v1212
    %v1215 = vextract.low.u32 %v1214
    %v1216 = vextract.high.u32 %v1214
    %v1217 = vmul.u32.u64.compose %v1213, %v1208
    %v1218 = vextract.low.u32 %v1217
    %v1219 = vextract.high.u32 %v1217
    %v1220 = vmul.u32 %v1213, %v1204
    %v1221 = vadd.s32 %v1216, %v1218
    %vm1222 = vc.u32 %v1216, %v1218
    %v1223 = vadd.s32 %v1219, 1
    %v1224 = vsel %vm1222, %v1223, %v1219
    %v1225 = vadd.s32 %v1220, %v1224
    %v1226 = vadd.s32 %v1225, 536870912
    %v1227 = vshrl.u32 %v1226, 30
    %v1228 = vshll.u32 %v1227, 30
    %v1229 = vsub.s32 %v1225, %v1228
    %vm1230 = vcmp.lt.s32.totalorder %v1229, 0
    %v1231 = vsub.s32 0, %v1229
    %v1232 = vsel %vm1230, %v1231, %v1229
    %v1233 = vclz %v1232
    %v1234 = vsub.s32 %v1233, 2
    %vm1235 = vcmp.gt.s32.totalorder 0, %v1234
    %v1236 = vsel %vm1235, 0, %v1234
    %v1237 = vsub.s32 32, %v1236
    %v1238 = vshll.u32 %v1229, %v1236
    %v1239 = vshrl.u32 %v1221, %v1237
    %v1240 = vor.u32 %v1238, %v1239
    %v1241 = vsub.s32 4294967266, %v1236
    %v1242 = vadd.s32 %v1241, 127
    %v1243 = vshll.u32 %v1242, 23
    %v1244 = vor.u32 4788187, %v1243
    %v1245 = vand.u32 2147483647, %v1244
    %v1247 = vcvt.s32.f32 %v1240
    %v1248 = vmul.f32 %v1247, %v1245
    %v1249 = vxor.u32 %v1248, 2147483648
    %v1250 = vsel %vm1167, %v1249, %v1248
    %v1251 = vsub.s32 4, %v1227
    %v1252 = vsel %vm1167, %v1251, %v1227
    %v1253 = vsel %vm1166, %v206, %v1250
    %v1254 = vsel %vm1166, 0, %v1252
    %v1255 = vcosq.f32.pop %v1253
    %v1256 = vsinq.f32.pop %v1253
    %vm1257 = vweird.f32 %v206
    %v1258 = vadd.s32 %v1254, 3
    %v1259 = vand.u32 %v1258, 3
    %vm1260 = vcmp.lt.s32.totalorder %v1259, 2
    %vm1261 = vcmp.eq.s32.totalorder %v1259, 0
    %v1262 = vxor.u32 %v1256, 2147483648
    %v1263 = vsel %vm1261, %v1255, %v1262
    %vm1264 = vcmp.eq.s32.totalorder %v1259, 2
    %v1265 = vxor.u32 %v1255, 2147483648
    %v1266 = vsel %vm1264, %v1265, %v1256
    %v1267 = vsel %vm1260, %v1263, %v1266
    %v1268 = vsel %vm1257, nan, %v1267
    %v1269 = vand.u32 2147483647, %v207
    %vm1270 = vcmp.le.f32.partialorder %v1269, 0.7853982
    %vm1271 = vcmp.lt.s32.totalorder %v207, 0
    %v1272 = vand.u32 %v207, 2139095040
    %v1273 = vshrl.u32 %v1272, 23
    %v1274 = vsub.s32 %v1273, 127
    %v1275 = vand.u32 2147483647, %v207
    %v1276 = vand.u32 %v1275, 8388607
    %v1277 = vor.u32 %v1276, 8388608
    %v1278 = vsub.s32 0, %v1277
    %v1279 = vadd.s32 %v1274, 1
    %vm1280 = vcmp.gt.s32.totalorder %v1279, 0
    %v1281 = vsel %vm1280, %v1279, 0
    %v1282 = vshrl.u32 %v1281, 5
    %v1283 = vand.u32 %v1281, 31
    %v1284 = vsub.s32 32, %v1283
    %v1285 = vshrl.u32 683565275, %v1284
    %v1286 = vshll.u32 683565275, %v1283
    %v1287 = vshrl.u32 2475754826, %v1284
    %v1288 = vor.u32 %v1286, %v1287
    %v1289 = vshll.u32 2475754826, %v1283
    %v1290 = vshrl.u32 2131351028, %v1284
    %v1291 = vor.u32 %v1289, %v1290
    %v1292 = vshll.u32 2131351028, %v1283
    %v1293 = vshrl.u32 2102212464, %v1284
    %v1294 = vor.u32 %v1292, %v1293
    %v1295 = vshll.u32 2102212464, %v1283
    %v1296 = vshrl.u32 920167782, %v1284
    %v1297 = vor.u32 %v1295, %v1296
    %v1298 = vshll.u32 920167782, %v1283
    %v1299 = vshrl.u32 1326507024, %v1284
    %v1300 = vor.u32 %v1298, %v1299
    %vm1301 = vcmp.lt.s32.totalorder %v1282, 1
    %vm1302 = vcmp.lt.s32.totalorder %v1282, 2
    %vm1303 = vcmp.lt.s32.totalorder %v1282, 3
    %vm1304 = vcmp.lt.s32.totalorder %v1282, 4
    %v1305 = vsel %vm1301, %v1285, %v1288
    %v1306 = vsel %vm1304, %v1294, 2102212464
    %v1307 = vsel %vm1303, %v1291, %v1306
    %v1308 = vsel %vm1302, %v1305, %v1307
    %v1309 = vsel %vm1301, %v1288, %v1291
    %v1310 = vsel %vm1304, %v1297, 920167782
    %v1311 = vsel %vm1303, %v1294, %v1310
    %v1312 = vsel %vm1302, %v1309, %v1311
    %v1313 = vsel %vm1301, %v1291, %v1294
    %v1314 = vsel %vm1304, %v1300, 1326507024
    %v1315 = vsel %vm1303, %v1297, %v1314
    %v1316 = vsel %vm1302, %v1313, %v1315
    %v1317 = vshll.u32 %v1277, 8
    %v1318 = vmul.u32.u64.compose %v1317, %v1316
    %v1319 = vextract.low.u32 %v1318
    %v1320 = vextract.high.u32 %v1318
    %v1321 = vmul.u32.u64.compose %v1317, %v1312
    %v1322 = vextract.low.u32 %v1321
    %v1323 = vextract.high.u32 %v1321
    %v1324 = vmul.u32 %v1317, %v1308
    %v1325 = vadd.s32 %v1320, %v1322
    %vm1326 = vc.u32 %v1320, %v1322
    %v1327 = vadd.s32 %v1323, 1
    %v1328 = vsel %vm1326, %v1327, %v1323
    %v1329 = vadd.s32 %v1324, %v1328
    %v1330 = vadd.s32 %v1329, 536870912
    %v1331 = vshrl.u32 %v1330, 30
    %v1332 = vshll.u32 %v1331, 30
    %v1333 = vsub.s32 %v1329, %v1332
    %vm1334 = vcmp.lt.s32.totalorder %v1333, 0
    %v1335 = vsub.s32 0, %v1333
    %v1336 = vsel %vm1334, %v1335, %v1333
    %v1337 = vclz %v1336
    %v1338 = vsub.s32 %v1337, 2
    %vm1339 = vcmp.gt.s32.totalorder 0, %v1338
    %v1340 = vsel %vm1339, 0, %v1338
    %v1341 = vsub.s32 32, %v1340
    %v1342 = vshll.u32 %v1333, %v1340
    %v1343 = vshrl.u32 %v1325, %v1341
    %v1344 = vor.u32 %v1342, %v1343
    %v1345 = vsub.s32 4294967266, %v1340
    %v1346 = vadd.s32 %v1345, 127
    %v1347 = vshll.u32 %v1346, 23
    %v1348 = vor.u32 4788187, %v1347
    %v1349 = vand.u32 2147483647, %v1348
    %v1351 = vcvt.s32.f32 %v1344
    %v1352 = vmul.f32 %v1351, %v1349
    %v1353 = vxor.u32 %v1352, 2147483648
    %v1354 = vsel %vm1271, %v1353, %v1352
    %v1355 = vsub.s32 4, %v1331
    %v1356 = vsel %vm1271, %v1355, %v1331
    %v1357 = vsel %vm1270, %v207, %v1354
    %v1358 = vsel %vm1270, 0, %v1356
    %v1359 = vcosq.f32.pop %v1357
    %v1360 = vsinq.f32.pop %v1357
    %vm1361 = vweird.f32 %v207
    %v1362 = vadd.s32 %v1358, 3
    %v1363 = vand.u32 %v1362, 3
    %vm1364 = vcmp.lt.s32.totalorder %v1363, 2
    %vm1365 = vcmp.eq.s32.totalorder %v1363, 0
    %v1366 = vxor.u32 %v1360, 2147483648
    %v1367 = vsel %vm1365, %v1359, %v1366
    %vm1368 = vcmp.eq.s32.totalorder %v1363, 2
    %v1369 = vxor.u32 %v1359, 2147483648
    %v1370 = vsel %vm1368, %v1369, %v1360
    %v1371 = vsel %vm1364, %v1367, %v1370
    %v1372 = vsel %vm1361, nan, %v1371
    %v1373 = vand.u32 2147483647, %v208
    %vm1374 = vcmp.le.f32.partialorder %v1373, 0.7853982
    %vm1375 = vcmp.lt.s32.totalorder %v208, 0
    %v1376 = vand.u32 %v208, 2139095040
    %v1377 = vshrl.u32 %v1376, 23
    %v1378 = vsub.s32 %v1377, 127
    %v1379 = vand.u32 2147483647, %v208
    %v1380 = vand.u32 %v1379, 8388607
    %v1381 = vor.u32 %v1380, 8388608
    %v1382 = vsub.s32 0, %v1381
    %v1383 = vadd.s32 %v1378, 1
    %vm1384 = vcmp.gt.s32.totalorder %v1383, 0
    %v1385 = vsel %vm1384, %v1383, 0
    %v1386 = vshrl.u32 %v1385, 5
    %v1387 = vand.u32 %v1385, 31
    %v1388 = vsub.s32 32, %v1387
    %v1389 = vshrl.u32 683565275, %v1388
    %v1390 = vshll.u32 683565275, %v1387
    %v1391 = vshrl.u32 2475754826, %v1388
    %v1392 = vor.u32 %v1390, %v1391
    %v1393 = vshll.u32 2475754826, %v1387
    %v1394 = vshrl.u32 2131351028, %v1388
    %v1395 = vor.u32 %v1393, %v1394
    %v1396 = vshll.u32 2131351028, %v1387
    %v1397 = vshrl.u32 2102212464, %v1388
    %v1398 = vor.u32 %v1396, %v1397
    %v1399 = vshll.u32 2102212464, %v1387
    %v1400 = vshrl.u32 920167782, %v1388
    %v1401 = vor.u32 %v1399, %v1400
    %v1402 = vshll.u32 920167782, %v1387
    %v1403 = vshrl.u32 1326507024, %v1388
    %v1404 = vor.u32 %v1402, %v1403
    %vm1405 = vcmp.lt.s32.totalorder %v1386, 1
    %vm1406 = vcmp.lt.s32.totalorder %v1386, 2
    %vm1407 = vcmp.lt.s32.totalorder %v1386, 3
    %vm1408 = vcmp.lt.s32.totalorder %v1386, 4
    %v1409 = vsel %vm1405, %v1389, %v1392
    %v1410 = vsel %vm1408, %v1398, 2102212464
    %v1411 = vsel %vm1407, %v1395, %v1410
    %v1412 = vsel %vm1406, %v1409, %v1411
    %v1413 = vsel %vm1405, %v1392, %v1395
    %v1414 = vsel %vm1408, %v1401, 920167782
    %v1415 = vsel %vm1407, %v1398, %v1414
    %v1416 = vsel %vm1406, %v1413, %v1415
    %v1417 = vsel %vm1405, %v1395, %v1398
    %v1418 = vsel %vm1408, %v1404, 1326507024
    %v1419 = vsel %vm1407, %v1401, %v1418
    %v1420 = vsel %vm1406, %v1417, %v1419
    %v1421 = vshll.u32 %v1381, 8
    %v1422 = vmul.u32.u64.compose %v1421, %v1420
    %v1423 = vextract.low.u32 %v1422
    %v1424 = vextract.high.u32 %v1422
    %v1425 = vmul.u32.u64.compose %v1421, %v1416
    %v1426 = vextract.low.u32 %v1425
    %v1427 = vextract.high.u32 %v1425
    %v1428 = vmul.u32 %v1421, %v1412
    %v1429 = vadd.s32 %v1424, %v1426
    %vm1430 = vc.u32 %v1424, %v1426
    %v1431 = vadd.s32 %v1427, 1
    %v1432 = vsel %vm1430, %v1431, %v1427
    %v1433 = vadd.s32 %v1428, %v1432
    %v1434 = vadd.s32 %v1433, 536870912
    %v1435 = vshrl.u32 %v1434, 30
    %v1436 = vshll.u32 %v1435, 30
    %v1437 = vsub.s32 %v1433, %v1436
    %vm1438 = vcmp.lt.s32.totalorder %v1437, 0
    %v1439 = vsub.s32 0, %v1437
    %v1440 = vsel %vm1438, %v1439, %v1437
    %v1441 = vclz %v1440
    %v1442 = vsub.s32 %v1441, 2
    %vm1443 = vcmp.gt.s32.totalorder 0, %v1442
    %v1444 = vsel %vm1443, 0, %v1442
    %v1445 = vsub.s32 32, %v1444
    %v1446 = vshll.u32 %v1437, %v1444
    %v1447 = vshrl.u32 %v1429, %v1445
    %v1448 = vor.u32 %v1446, %v1447
    %v1449 = vsub.s32 4294967266, %v1444
    %v1450 = vadd.s32 %v1449, 127
    %v1451 = vshll.u32 %v1450, 23
    %v1452 = vor.u32 4788187, %v1451
    %v1453 = vand.u32 2147483647, %v1452
    %v1455 = vcvt.s32.f32 %v1448
    %v1456 = vmul.f32 %v1455, %v1453
    %v1457 = vxor.u32 %v1456, 2147483648
    %v1458 = vsel %vm1375, %v1457, %v1456
    %v1459 = vsub.s32 4, %v1435
    %v1460 = vsel %vm1375, %v1459, %v1435
    %v1461 = vsel %vm1374, %v208, %v1458
    %v1462 = vsel %vm1374, 0, %v1460
    %v1463 = vcosq.f32.pop %v1461
    %v1464 = vsinq.f32.pop %v1461
    %vm1465 = vweird.f32 %v208
    %v1466 = vadd.s32 %v1462, 3
    %v1467 = vand.u32 %v1466, 3
    %vm1468 = vcmp.lt.s32.totalorder %v1467, 2
    %vm1469 = vcmp.eq.s32.totalorder %v1467, 0
    %v1470 = vxor.u32 %v1464, 2147483648
    %v1471 = vsel %vm1469, %v1463, %v1470
    %vm1472 = vcmp.eq.s32.totalorder %v1467, 2
    %v1473 = vxor.u32 %v1463, 2147483648
    %v1474 = vsel %vm1472, %v1473, %v1464
    %v1475 = vsel %vm1468, %v1471, %v1474
    %v1476 = vsel %vm1465, nan, %v1475
    %v1477 = vand.u32 2147483647, %v209
    %vm1478 = vcmp.le.f32.partialorder %v1477, 0.7853982
    %vm1479 = vcmp.lt.s32.totalorder %v209, 0
    %v1480 = vand.u32 %v209, 2139095040
    %v1481 = vshrl.u32 %v1480, 23
    %v1482 = vsub.s32 %v1481, 127
    %v1483 = vand.u32 2147483647, %v209
    %v1484 = vand.u32 %v1483, 8388607
    %v1485 = vor.u32 %v1484, 8388608
    %v1486 = vsub.s32 0, %v1485
    %v1487 = vadd.s32 %v1482, 1
    %vm1488 = vcmp.gt.s32.totalorder %v1487, 0
    %v1489 = vsel %vm1488, %v1487, 0
    %v1490 = vshrl.u32 %v1489, 5
    %v1491 = vand.u32 %v1489, 31
    %v1492 = vsub.s32 32, %v1491
    %v1493 = vshrl.u32 683565275, %v1492
    %v1494 = vshll.u32 683565275, %v1491
    %v1495 = vshrl.u32 2475754826, %v1492
    %v1496 = vor.u32 %v1494, %v1495
    %v1497 = vshll.u32 2475754826, %v1491
    %v1498 = vshrl.u32 2131351028, %v1492
    %v1499 = vor.u32 %v1497, %v1498
    %v1500 = vshll.u32 2131351028, %v1491
    %v1501 = vshrl.u32 2102212464, %v1492
    %v1502 = vor.u32 %v1500, %v1501
    %v1503 = vshll.u32 2102212464, %v1491
    %v1504 = vshrl.u32 920167782, %v1492
    %v1505 = vor.u32 %v1503, %v1504
    %v1506 = vshll.u32 920167782, %v1491
    %v1507 = vshrl.u32 1326507024, %v1492
    %v1508 = vor.u32 %v1506, %v1507
    %vm1509 = vcmp.lt.s32.totalorder %v1490, 1
    %vm1510 = vcmp.lt.s32.totalorder %v1490, 2
    %vm1511 = vcmp.lt.s32.totalorder %v1490, 3
    %vm1512 = vcmp.lt.s32.totalorder %v1490, 4
    %v1513 = vsel %vm1509, %v1493, %v1496
    %v1514 = vsel %vm1512, %v1502, 2102212464
    %v1515 = vsel %vm1511, %v1499, %v1514
    %v1516 = vsel %vm1510, %v1513, %v1515
    %v1517 = vsel %vm1509, %v1496, %v1499
    %v1518 = vsel %vm1512, %v1505, 920167782
    %v1519 = vsel %vm1511, %v1502, %v1518
    %v1520 = vsel %vm1510, %v1517, %v1519
    %v1521 = vsel %vm1509, %v1499, %v1502
    %v1522 = vsel %vm1512, %v1508, 1326507024
    %v1523 = vsel %vm1511, %v1505, %v1522
    %v1524 = vsel %vm1510, %v1521, %v1523
    %v1525 = vshll.u32 %v1485, 8
    %v1526 = vmul.u32.u64.compose %v1525, %v1524
    %v1527 = vextract.low.u32 %v1526
    %v1528 = vextract.high.u32 %v1526
    %v1529 = vmul.u32.u64.compose %v1525, %v1520
    %v1530 = vextract.low.u32 %v1529
    %v1531 = vextract.high.u32 %v1529
    %v1532 = vmul.u32 %v1525, %v1516
    %v1533 = vadd.s32 %v1528, %v1530
    %vm1534 = vc.u32 %v1528, %v1530
    %v1535 = vadd.s32 %v1531, 1
    %v1536 = vsel %vm1534, %v1535, %v1531
    %v1537 = vadd.s32 %v1532, %v1536
    %v1538 = vadd.s32 %v1537, 536870912
    %v1539 = vshrl.u32 %v1538, 30
    %v1540 = vshll.u32 %v1539, 30
    %v1541 = vsub.s32 %v1537, %v1540
    %vm1542 = vcmp.lt.s32.totalorder %v1541, 0
    %v1543 = vsub.s32 0, %v1541
    %v1544 = vsel %vm1542, %v1543, %v1541
    %v1545 = vclz %v1544
    %v1546 = vsub.s32 %v1545, 2
    %vm1547 = vcmp.gt.s32.totalorder 0, %v1546
    %v1548 = vsel %vm1547, 0, %v1546
    %v1549 = vsub.s32 32, %v1548
    %v1550 = vshll.u32 %v1541, %v1548
    %v1551 = vshrl.u32 %v1533, %v1549
    %v1552 = vor.u32 %v1550, %v1551
    %v1553 = vsub.s32 4294967266, %v1548
    %v1554 = vadd.s32 %v1553, 127
    %v1555 = vshll.u32 %v1554, 23
    %v1556 = vor.u32 4788187, %v1555
    %v1557 = vand.u32 2147483647, %v1556
    %v1559 = vcvt.s32.f32 %v1552
    %v1560 = vmul.f32 %v1559, %v1557
    %v1561 = vxor.u32 %v1560, 2147483648
    %v1562 = vsel %vm1479, %v1561, %v1560
    %v1563 = vsub.s32 4, %v1539
    %v1564 = vsel %vm1479, %v1563, %v1539
    %v1565 = vsel %vm1478, %v209, %v1562
    %v1566 = vsel %vm1478, 0, %v1564
    %v1567 = vcosq.f32.pop %v1565
    %v1568 = vsinq.f32.pop %v1565
    %vm1569 = vweird.f32 %v209
    %v1570 = vadd.s32 %v1566, 3
    %v1571 = vand.u32 %v1570, 3
    %vm1572 = vcmp.lt.s32.totalorder %v1571, 2
    %vm1573 = vcmp.eq.s32.totalorder %v1571, 0
    %v1574 = vxor.u32 %v1568, 2147483648
    %v1575 = vsel %vm1573, %v1567, %v1574
    %vm1576 = vcmp.eq.s32.totalorder %v1571, 2
    %v1577 = vxor.u32 %v1567, 2147483648
    %v1578 = vsel %vm1576, %v1577, %v1568
    %v1579 = vsel %vm1572, %v1575, %v1578
    %v1580 = vsel %vm1569, nan, %v1579
    %v1581 = vand.u32 2147483647, %v210
    %vm1582 = vcmp.le.f32.partialorder %v1581, 0.7853982
    %vm1583 = vcmp.lt.s32.totalorder %v210, 0
    %v1584 = vand.u32 %v210, 2139095040
    %v1585 = vshrl.u32 %v1584, 23
    %v1586 = vsub.s32 %v1585, 127
    %v1587 = vand.u32 2147483647, %v210
    %v1588 = vand.u32 %v1587, 8388607
    %v1589 = vor.u32 %v1588, 8388608
    %v1590 = vsub.s32 0, %v1589
    %v1591 = vadd.s32 %v1586, 1
    %vm1592 = vcmp.gt.s32.totalorder %v1591, 0
    %v1593 = vsel %vm1592, %v1591, 0
    %v1594 = vshrl.u32 %v1593, 5
    %v1595 = vand.u32 %v1593, 31
    %v1596 = vsub.s32 32, %v1595
    %v1597 = vshrl.u32 683565275, %v1596
    %v1598 = vshll.u32 683565275, %v1595
    %v1599 = vshrl.u32 2475754826, %v1596
    %v1600 = vor.u32 %v1598, %v1599
    %v1601 = vshll.u32 2475754826, %v1595
    %v1602 = vshrl.u32 2131351028, %v1596
    %v1603 = vor.u32 %v1601, %v1602
    %v1604 = vshll.u32 2131351028, %v1595
    %v1605 = vshrl.u32 2102212464, %v1596
    %v1606 = vor.u32 %v1604, %v1605
    %v1607 = vshll.u32 2102212464, %v1595
    %v1608 = vshrl.u32 920167782, %v1596
    %v1609 = vor.u32 %v1607, %v1608
    %v1610 = vshll.u32 920167782, %v1595
    %v1611 = vshrl.u32 1326507024, %v1596
    %v1612 = vor.u32 %v1610, %v1611
    %vm1613 = vcmp.lt.s32.totalorder %v1594, 1
    %vm1614 = vcmp.lt.s32.totalorder %v1594, 2
    %vm1615 = vcmp.lt.s32.totalorder %v1594, 3
    %vm1616 = vcmp.lt.s32.totalorder %v1594, 4
    %v1617 = vsel %vm1613, %v1597, %v1600
    %v1618 = vsel %vm1616, %v1606, 2102212464
    %v1619 = vsel %vm1615, %v1603, %v1618
    %v1620 = vsel %vm1614, %v1617, %v1619
    %v1621 = vsel %vm1613, %v1600, %v1603
    %v1622 = vsel %vm1616, %v1609, 920167782
    %v1623 = vsel %vm1615, %v1606, %v1622
    %v1624 = vsel %vm1614, %v1621, %v1623
    %v1625 = vsel %vm1613, %v1603, %v1606
    %v1626 = vsel %vm1616, %v1612, 1326507024
    %v1627 = vsel %vm1615, %v1609, %v1626
    %v1628 = vsel %vm1614, %v1625, %v1627
    %v1629 = vshll.u32 %v1589, 8
    %v1630 = vmul.u32.u64.compose %v1629, %v1628
    %v1631 = vextract.low.u32 %v1630
    %v1632 = vextract.high.u32 %v1630
    %v1633 = vmul.u32.u64.compose %v1629, %v1624
    %v1634 = vextract.low.u32 %v1633
    %v1635 = vextract.high.u32 %v1633
    %v1636 = vmul.u32 %v1629, %v1620
    %v1637 = vadd.s32 %v1632, %v1634
    %vm1638 = vc.u32 %v1632, %v1634
    %v1639 = vadd.s32 %v1635, 1
    %v1640 = vsel %vm1638, %v1639, %v1635
    %v1641 = vadd.s32 %v1636, %v1640
    %v1642 = vadd.s32 %v1641, 536870912
    %v1643 = vshrl.u32 %v1642, 30
    %v1644 = vshll.u32 %v1643, 30
    %v1645 = vsub.s32 %v1641, %v1644
    %vm1646 = vcmp.lt.s32.totalorder %v1645, 0
    %v1647 = vsub.s32 0, %v1645
    %v1648 = vsel %vm1646, %v1647, %v1645
    %v1649 = vclz %v1648
    %v1650 = vsub.s32 %v1649, 2
    %vm1651 = vcmp.gt.s32.totalorder 0, %v1650
    %v1652 = vsel %vm1651, 0, %v1650
    %v1653 = vsub.s32 32, %v1652
    %v1654 = vshll.u32 %v1645, %v1652
    %v1655 = vshrl.u32 %v1637, %v1653
    %v1656 = vor.u32 %v1654, %v1655
    %v1657 = vsub.s32 4294967266, %v1652
    %v1658 = vadd.s32 %v1657, 127
    %v1659 = vshll.u32 %v1658, 23
    %v1660 = vor.u32 4788187, %v1659
    %v1661 = vand.u32 2147483647, %v1660
    %v1663 = vcvt.s32.f32 %v1656
    %v1664 = vmul.f32 %v1663, %v1661
    %v1665 = vxor.u32 %v1664, 2147483648
    %v1666 = vsel %vm1583, %v1665, %v1664
    %v1667 = vsub.s32 4, %v1643
    %v1668 = vsel %vm1583, %v1667, %v1643
    %v1669 = vsel %vm1582, %v210, %v1666
    %v1670 = vsel %vm1582, 0, %v1668
    %v1671 = vcosq.f32.pop %v1669
    %v1672 = vsinq.f32.pop %v1669
    %vm1673 = vweird.f32 %v210
    %v1674 = vadd.s32 %v1670, 3
    %v1675 = vand.u32 %v1674, 3
    %vm1676 = vcmp.lt.s32.totalorder %v1675, 2
    %vm1677 = vcmp.eq.s32.totalorder %v1675, 0
    %v1678 = vxor.u32 %v1672, 2147483648
    %v1679 = vsel %vm1677, %v1671, %v1678
    %vm1680 = vcmp.eq.s32.totalorder %v1675, 2
    %v1681 = vxor.u32 %v1671, 2147483648
    %v1682 = vsel %vm1680, %v1681, %v1672
    %v1683 = vsel %vm1676, %v1679, %v1682
    %v1684 = vsel %vm1673, nan, %v1683
    %v1685 = vand.u32 2147483647, %v211
    %vm1686 = vcmp.le.f32.partialorder %v1685, 0.7853982
    %vm1687 = vcmp.lt.s32.totalorder %v211, 0
    %v1688 = vand.u32 %v211, 2139095040
    %v1689 = vshrl.u32 %v1688, 23
    %v1690 = vsub.s32 %v1689, 127
    %v1691 = vand.u32 2147483647, %v211
    %v1692 = vand.u32 %v1691, 8388607
    %v1693 = vor.u32 %v1692, 8388608
    %v1694 = vsub.s32 0, %v1693
    %v1695 = vadd.s32 %v1690, 1
    %vm1696 = vcmp.gt.s32.totalorder %v1695, 0
    %v1697 = vsel %vm1696, %v1695, 0
    %v1698 = vshrl.u32 %v1697, 5
    %v1699 = vand.u32 %v1697, 31
    %v1700 = vsub.s32 32, %v1699
    %v1701 = vshrl.u32 683565275, %v1700
    %v1702 = vshll.u32 683565275, %v1699
    %v1703 = vshrl.u32 2475754826, %v1700
    %v1704 = vor.u32 %v1702, %v1703
    %v1705 = vshll.u32 2475754826, %v1699
    %v1706 = vshrl.u32 2131351028, %v1700
    %v1707 = vor.u32 %v1705, %v1706
    %v1708 = vshll.u32 2131351028, %v1699
    %v1709 = vshrl.u32 2102212464, %v1700
    %v1710 = vor.u32 %v1708, %v1709
    %v1711 = vshll.u32 2102212464, %v1699
    %v1712 = vshrl.u32 920167782, %v1700
    %v1713 = vor.u32 %v1711, %v1712
    %v1714 = vshll.u32 920167782, %v1699
    %v1715 = vshrl.u32 1326507024, %v1700
    %v1716 = vor.u32 %v1714, %v1715
    %vm1717 = vcmp.lt.s32.totalorder %v1698, 1
    %vm1718 = vcmp.lt.s32.totalorder %v1698, 2
    %vm1719 = vcmp.lt.s32.totalorder %v1698, 3
    %vm1720 = vcmp.lt.s32.totalorder %v1698, 4
    %v1721 = vsel %vm1717, %v1701, %v1704
    %v1722 = vsel %vm1720, %v1710, 2102212464
    %v1723 = vsel %vm1719, %v1707, %v1722
    %v1724 = vsel %vm1718, %v1721, %v1723
    %v1725 = vsel %vm1717, %v1704, %v1707
    %v1726 = vsel %vm1720, %v1713, 920167782
    %v1727 = vsel %vm1719, %v1710, %v1726
    %v1728 = vsel %vm1718, %v1725, %v1727
    %v1729 = vsel %vm1717, %v1707, %v1710
    %v1730 = vsel %vm1720, %v1716, 1326507024
    %v1731 = vsel %vm1719, %v1713, %v1730
    %v1732 = vsel %vm1718, %v1729, %v1731
    %v1733 = vshll.u32 %v1693, 8
    %v1734 = vmul.u32.u64.compose %v1733, %v1732
    %v1735 = vextract.low.u32 %v1734
    %v1736 = vextract.high.u32 %v1734
    %v1737 = vmul.u32.u64.compose %v1733, %v1728
    %v1738 = vextract.low.u32 %v1737
    %v1739 = vextract.high.u32 %v1737
    %v1740 = vmul.u32 %v1733, %v1724
    %v1741 = vadd.s32 %v1736, %v1738
    %vm1742 = vc.u32 %v1736, %v1738
    %v1743 = vadd.s32 %v1739, 1
    %v1744 = vsel %vm1742, %v1743, %v1739
    %v1745 = vadd.s32 %v1740, %v1744
    %v1746 = vadd.s32 %v1745, 536870912
    %v1747 = vshrl.u32 %v1746, 30
    %v1748 = vshll.u32 %v1747, 30
    %v1749 = vsub.s32 %v1745, %v1748
    %vm1750 = vcmp.lt.s32.totalorder %v1749, 0
    %v1751 = vsub.s32 0, %v1749
    %v1752 = vsel %vm1750, %v1751, %v1749
    %v1753 = vclz %v1752
    %v1754 = vsub.s32 %v1753, 2
    %vm1755 = vcmp.gt.s32.totalorder 0, %v1754
    %v1756 = vsel %vm1755, 0, %v1754
    %v1757 = vsub.s32 32, %v1756
    %v1758 = vshll.u32 %v1749, %v1756
    %v1759 = vshrl.u32 %v1741, %v1757
    %v1760 = vor.u32 %v1758, %v1759
    %v1761 = vsub.s32 4294967266, %v1756
    %v1762 = vadd.s32 %v1761, 127
    %v1763 = vshll.u32 %v1762, 23
    %v1764 = vor.u32 4788187, %v1763
    %v1765 = vand.u32 2147483647, %v1764
    %v1767 = vcvt.s32.f32 %v1760
    %v1768 = vmul.f32 %v1767, %v1765
    %v1769 = vxor.u32 %v1768, 2147483648
    %v1770 = vsel %vm1687, %v1769, %v1768
    %v1771 = vsub.s32 4, %v1747
    %v1772 = vsel %vm1687, %v1771, %v1747
    %v1773 = vsel %vm1686, %v211, %v1770
    %v1774 = vsel %vm1686, 0, %v1772
    %v1775 = vcosq.f32.pop %v1773
    %v1776 = vsinq.f32.pop %v1773
    %vm1777 = vweird.f32 %v211
    %v1778 = vadd.s32 %v1774, 3
    %v1779 = vand.u32 %v1778, 3
    %vm1780 = vcmp.lt.s32.totalorder %v1779, 2
    %vm1781 = vcmp.eq.s32.totalorder %v1779, 0
    %v1782 = vxor.u32 %v1776, 2147483648
    %v1783 = vsel %vm1781, %v1775, %v1782
    %vm1784 = vcmp.eq.s32.totalorder %v1779, 2
    %v1785 = vxor.u32 %v1775, 2147483648
    %v1786 = vsel %vm1784, %v1785, %v1776
    %v1787 = vsel %vm1780, %v1783, %v1786
    %v1788 = vsel %vm1777, nan, %v1787
    %v1789 = vand.u32 2147483647, %v212
    %vm1790 = vcmp.le.f32.partialorder %v1789, 0.7853982
    %vm1791 = vcmp.lt.s32.totalorder %v212, 0
    %v1792 = vand.u32 %v212, 2139095040
    %v1793 = vshrl.u32 %v1792, 23
    %v1794 = vsub.s32 %v1793, 127
    %v1795 = vand.u32 2147483647, %v212
    %v1796 = vand.u32 %v1795, 8388607
    %v1797 = vor.u32 %v1796, 8388608
    %v1798 = vsub.s32 0, %v1797
    %v1799 = vadd.s32 %v1794, 1
    %vm1800 = vcmp.gt.s32.totalorder %v1799, 0
    %v1801 = vsel %vm1800, %v1799, 0
    %v1802 = vshrl.u32 %v1801, 5
    %v1803 = vand.u32 %v1801, 31
    %v1804 = vsub.s32 32, %v1803
    %v1805 = vshrl.u32 683565275, %v1804
    %v1806 = vshll.u32 683565275, %v1803
    %v1807 = vshrl.u32 2475754826, %v1804
    %v1808 = vor.u32 %v1806, %v1807
    %v1809 = vshll.u32 2475754826, %v1803
    %v1810 = vshrl.u32 2131351028, %v1804
    %v1811 = vor.u32 %v1809, %v1810
    %v1812 = vshll.u32 2131351028, %v1803
    %v1813 = vshrl.u32 2102212464, %v1804
    %v1814 = vor.u32 %v1812, %v1813
    %v1815 = vshll.u32 2102212464, %v1803
    %v1816 = vshrl.u32 920167782, %v1804
    %v1817 = vor.u32 %v1815, %v1816
    %v1818 = vshll.u32 920167782, %v1803
    %v1819 = vshrl.u32 1326507024, %v1804
    %v1820 = vor.u32 %v1818, %v1819
    %vm1821 = vcmp.lt.s32.totalorder %v1802, 1
    %vm1822 = vcmp.lt.s32.totalorder %v1802, 2
    %vm1823 = vcmp.lt.s32.totalorder %v1802, 3
    %vm1824 = vcmp.lt.s32.totalorder %v1802, 4
    %v1825 = vsel %vm1821, %v1805, %v1808
    %v1826 = vsel %vm1824, %v1814, 2102212464
    %v1827 = vsel %vm1823, %v1811, %v1826
    %v1828 = vsel %vm1822, %v1825, %v1827
    %v1829 = vsel %vm1821, %v1808, %v1811
    %v1830 = vsel %vm1824, %v1817, 920167782
    %v1831 = vsel %vm1823, %v1814, %v1830
    %v1832 = vsel %vm1822, %v1829, %v1831
    %v1833 = vsel %vm1821, %v1811, %v1814
    %v1834 = vsel %vm1824, %v1820, 1326507024
    %v1835 = vsel %vm1823, %v1817, %v1834
    %v1836 = vsel %vm1822, %v1833, %v1835
    %v1837 = vshll.u32 %v1797, 8
    %v1838 = vmul.u32.u64.compose %v1837, %v1836
    %v1839 = vextract.low.u32 %v1838
    %v1840 = vextract.high.u32 %v1838
    %v1841 = vmul.u32.u64.compose %v1837, %v1832
    %v1842 = vextract.low.u32 %v1841
    %v1843 = vextract.high.u32 %v1841
    %v1844 = vmul.u32 %v1837, %v1828
    %v1845 = vadd.s32 %v1840, %v1842
    %vm1846 = vc.u32 %v1840, %v1842
    %v1847 = vadd.s32 %v1843, 1
    %v1848 = vsel %vm1846, %v1847, %v1843
    %v1849 = vadd.s32 %v1844, %v1848
    %v1850 = vadd.s32 %v1849, 536870912
    %v1851 = vshrl.u32 %v1850, 30
    %v1852 = vshll.u32 %v1851, 30
    %v1853 = vsub.s32 %v1849, %v1852
    %vm1854 = vcmp.lt.s32.totalorder %v1853, 0
    %v1855 = vsub.s32 0, %v1853
    %v1856 = vsel %vm1854, %v1855, %v1853
    %v1857 = vclz %v1856
    %v1858 = vsub.s32 %v1857, 2
    %vm1859 = vcmp.gt.s32.totalorder 0, %v1858
    %v1860 = vsel %vm1859, 0, %v1858
    %v1861 = vsub.s32 32, %v1860
    %v1862 = vshll.u32 %v1853, %v1860
    %v1863 = vshrl.u32 %v1845, %v1861
    %v1864 = vor.u32 %v1862, %v1863
    %v1865 = vsub.s32 4294967266, %v1860
    %v1866 = vadd.s32 %v1865, 127
    %v1867 = vshll.u32 %v1866, 23
    %v1868 = vor.u32 4788187, %v1867
    %v1869 = vand.u32 2147483647, %v1868
    %v1871 = vcvt.s32.f32 %v1864
    %v1872 = vmul.f32 %v1871, %v1869
    %v1873 = vxor.u32 %v1872, 2147483648
    %v1874 = vsel %vm1791, %v1873, %v1872
    %v1875 = vsub.s32 4, %v1851
    %v1876 = vsel %vm1791, %v1875, %v1851
    %v1877 = vsel %vm1790, %v212, %v1874
    %v1878 = vsel %vm1790, 0, %v1876
    %v1879 = vcosq.f32.pop %v1877
    %v1880 = vsinq.f32.pop %v1877
    %vm1881 = vweird.f32 %v212
    %v1882 = vadd.s32 %v1878, 3
    %v1883 = vand.u32 %v1882, 3
    %vm1884 = vcmp.lt.s32.totalorder %v1883, 2
    %vm1885 = vcmp.eq.s32.totalorder %v1883, 0
    %v1886 = vxor.u32 %v1880, 2147483648
    %v1887 = vsel %vm1885, %v1879, %v1886
    %vm1888 = vcmp.eq.s32.totalorder %v1883, 2
    %v1889 = vxor.u32 %v1879, 2147483648
    %v1890 = vsel %vm1888, %v1889, %v1880
    %v1891 = vsel %vm1884, %v1887, %v1890
    %v1892 = vsel %vm1881, nan, %v1891
    %v1893 = vadd.f32 %v213, %v332
    %v1894 = vadd.f32 %v214, %v436
    %v1895 = vadd.f32 %v215, %v540
    %v1896 = vadd.f32 %v216, %v644
    %v1897 = vadd.f32 %v217, %v748
    %v1898 = vadd.f32 %v218, %v852
    %v1899 = vadd.f32 %v219, %v956
    %v1900 = vadd.f32 %v220, %v1060
    %v1901 = vadd.f32 %v221, %v1164
    %v1902 = vadd.f32 %v222, %v1268
    %v1903 = vadd.f32 %v223, %v1372
    %v1904 = vadd.f32 %v224, %v1476
    %v1905 = vadd.f32 %v225, %v1580
    %v1906 = vadd.f32 %v226, %v1684
    %v1907 = vadd.f32 %v227, %v1788
    %v1908 = vadd.f32 %v228, %v1892
    %vm1909 = vcmask 261120
    %1910 = vst.msk [vmem:[#allocation7] sm:$0xff] %vm1909, %v1893
    %1911 = vst.msk [vmem:[#allocation7 + $0x8] sm:$0xff] %vm1909, %v1894
    %1912 = vst.msk [vmem:[#allocation7 + $0x10] sm:$0xff] %vm1909, %v1895
    %1913 = vst.msk [vmem:[#allocation7 + $0x18] sm:$0xff] %vm1909, %v1896
    %1914 = vst.msk [vmem:[#allocation7 + $0x20] sm:$0xff] %vm1909, %v1897
    %1915 = vst.msk [vmem:[#allocation7 + $0x28] sm:$0xff] %vm1909, %v1898
    %1916 = vst.msk [vmem:[#allocation7 + $0x30] sm:$0xff] %vm1909, %v1899
    %1917 = vst.msk [vmem:[#allocation7 + $0x38] sm:$0xff] %vm1909, %v1900
    %1918 = vst.msk [vmem:[#allocation7 + $0x40] sm:$0xff] %vm1909, %v1901
    %1919 = vst.msk [vmem:[#allocation7 + $0x48] sm:$0xff] %vm1909, %v1902
    %1920 = vst.msk [vmem:[#allocation7 + $0x50] sm:$0xff] %vm1909, %v1903
    %1921 = vst.msk [vmem:[#allocation7 + $0x58] sm:$0xff] %vm1909, %v1904
    %1922 = vst.msk [vmem:[#allocation7 + $0x60] sm:$0xff] %vm1909, %v1905
    %1923 = vst.msk [vmem:[#allocation7 + $0x68] sm:$0xff] %vm1909, %v1906
    %1924 = vst.msk [vmem:[#allocation7 + $0x70] sm:$0xff] %vm1909, %v1907
    %1925 = vst.msk [vmem:[#allocation7 + $0x78] sm:$0xff] %vm1909, %v1908
    %v1926 = vpack.c.bf16 %v1894, %v1893
    %v1927 = vpack.c.bf16 %v1896, %v1895
    %v1928 = vpack.c.bf16 %v1898, %v1897
    %v1929 = vpack.c.bf16 %v1900, %v1899
    %v1930 = vpack.c.bf16 %v1902, %v1901
    %v1931 = vpack.c.bf16 %v1904, %v1903
    %v1932 = vpack.c.bf16 %v1906, %v1905
    %v1933 = vpack.c.bf16 %v1908, %v1907
    %v1934 = vld [vmem:[#allocation5] sm:$0xff]
    %v1935 = vld [vmem:[#allocation5 + $0x8] sm:$0xff]
    %v1936 = vld [vmem:[#allocation5 + $0x10] sm:$0xff]
    %v1937 = vld [vmem:[#allocation5 + $0x18] sm:$0xff]
    %v1938 = vld [vmem:[%s5] sm:$0x3]
    %v1940 = vlaneseq
    %v1941 = vshrl.u32 %v1940, 7
    %v1942 = vsub.s32 0, %v1941
    %v1943 = vrot.slane %v1938, %v1942
    %v1944 = vlaneseq
    %v1945 = vshrl.u32 %v1944, 7
    %v1946 = vsub.s32 1, %v1945
    %v1947 = vrot.slane %v1938, %v1946
    %v1954 = vunpack.c.l.b16 %v1934
    %v1955 = vunpack.c.h.b16 %v1934
    %v1956 = vunpack.c.l.b16 %v1935
    %v1957 = vunpack.c.h.b16 %v1935
    %v1958 = vunpack.c.l.b16 %v1936
    %v1959 = vunpack.c.h.b16 %v1936
    %v1960 = vunpack.c.l.b16 %v1937
    %v1961 = vunpack.c.h.b16 %v1937
    %v1962 = vpack.c.b16 %v1956, %v1954
    %v1963 = vpack.c.b16 %v1957, %v1955
    %v1964 = vpack.c.b16 %v1960, %v1958
    %v1965 = vpack.c.b16 %v1961, %v1959
    %v1971 = vsel %vm1909, %v1926, 0
    %v1974 = vsel %vm1909, %v1927, 0
    %v1977 = vsel %vm1909, %v1928, 0
    %v1980 = vsel %vm1909, %v1929, 0
    %v1983 = vsel %vm1909, %v1930, 0
    %v1986 = vsel %vm1909, %v1931, 0
    %v1989 = vsel %vm1909, %v1932, 0
    %v1992 = vsel %vm1909, %v1933, 0
    %1994 = vmatprep.subr.bf16.mxu0 %v1963
    %1995 = vmatpush1.bf16.msra.mxu0 %v1962
    %1996 = vmatprep.subr.bf16.mxu0 %v1965
    %1997 = vmatpush1.bf16.msra.mxu0 %v1964
    %1998 = vmatprep.subr.bf16.mxu0 0
    %1999 = vmatpush1.bf16.msra.mxu0 0
    %2000 = vmatprep.subr.bf16.mxu0 0
    %2001 = vmatpush1.bf16.msra.mxu0 0
    %2002 = vmatprep.subr.bf16.mxu0 0
    %2003 = vmatpush1.bf16.msra.mxu0 0
    %2004 = vmatprep.subr.bf16.mxu0 0
    %2005 = vmatpush1.bf16.msra.mxu0 0
    %2006 = vmatprep.subr.bf16.mxu0 0
    %2007 = vmatpush1.bf16.msra.mxu0 0
    %2008 = vmatprep.subr.bf16.mxu0 0
    %2009 = vmatpush1.bf16.msra.mxu0 0
    %2010 = vmatprep.subr.bf16.mxu0 0
    %2011 = vmatpush1.bf16.msra.mxu0 0
    %2012 = vmatprep.subr.bf16.mxu0 0
    %2013 = vmatpush1.bf16.msra.mxu0 0
    %2014 = vmatprep.subr.bf16.mxu0 0
    %2015 = vmatpush1.bf16.msra.mxu0 0
    %2016 = vmatprep.subr.bf16.mxu0 0
    %2017 = vmatpush1.bf16.msra.mxu0 0
    %2018 = vmatprep.subr.bf16.mxu0 0
    %2019 = vmatpush1.bf16.msra.mxu0 0
    %2020 = vmatprep.subr.bf16.mxu0 0
    %2021 = vmatpush1.bf16.msra.mxu0 0
    %2022 = vmatprep.subr.bf16.mxu0 0
    %2023 = vmatpush1.bf16.msra.mxu0 0
    %2024 = vmatprep.subr.bf16.mxu0 0
    %2025 = vmatpush1.bf16.msra.mxu0 0
    %2026 = vmatprep.mubr.bf16.mxu0 0
    %2027 = vmatmul.mubr.bf16.gmra.mrb[0].mxu0 %v1971
    %v2028 = vpop.f32.mrb[0].mxu0
    %v2029 = vadd.f32 %v1943, %v2028
    %v2030 = vpop.f32.mrb[0].mxu0
    %v2031 = vadd.f32 %v1947, %v2030
    %v2032 = vpop.f32.mrb[0].mxu0
    %v2033 = vadd.f32 %v1943, %v2032
    %v2034 = vpop.f32.mrb[0].mxu0
    %v2035 = vadd.f32 %v1947, %v2034
    %2036 = vmatprep.mubr.bf16.mxu0 0
    %2037 = vmatmul.mubr.bf16.gmra.mrb[0].mxu0 %v1974
    %v2038 = vpop.f32.mrb[0].mxu0
    %v2039 = vadd.f32 %v1943, %v2038
    %v2040 = vpop.f32.mrb[0].mxu0
    %v2041 = vadd.f32 %v1947, %v2040
    %v2042 = vpop.f32.mrb[0].mxu0
    %v2043 = vadd.f32 %v1943, %v2042
    %v2044 = vpop.f32.mrb[0].mxu0
    %v2045 = vadd.f32 %v1947, %v2044
    %2046 = vmatprep.mubr.bf16.mxu0 0
    %2047 = vmatmul.mubr.bf16.gmra.mrb[0].mxu0 %v1977
    %v2048 = vpop.f32.mrb[0].mxu0
    %v2049 = vadd.f32 %v1943, %v2048
    %v2050 = vpop.f32.mrb[0].mxu0
    %v2051 = vadd.f32 %v1947, %v2050
    %v2052 = vpop.f32.mrb[0].mxu0
    %v2053 = vadd.f32 %v1943, %v2052
    %v2054 = vpop.f32.mrb[0].mxu0
    %v2055 = vadd.f32 %v1947, %v2054
    %2056 = vmatprep.mubr.bf16.mxu0 0
    %2057 = vmatmul.mubr.bf16.gmra.mrb[0].mxu0 %v1980
    %v2058 = vpop.f32.mrb[0].mxu0
    %v2059 = vadd.f32 %v1943, %v2058
    %v2060 = vpop.f32.mrb[0].mxu0
    %v2061 = vadd.f32 %v1947, %v2060
    %v2062 = vpop.f32.mrb[0].mxu0
    %v2063 = vadd.f32 %v1943, %v2062
    %v2064 = vpop.f32.mrb[0].mxu0
    %v2065 = vadd.f32 %v1947, %v2064
    %2066 = vmatprep.mubr.bf16.mxu0 0
    %2067 = vmatmul.mubr.bf16.gmra.mrb[0].mxu0 %v1983
    %v2068 = vpop.f32.mrb[0].mxu0
    %v2069 = vadd.f32 %v1943, %v2068
    %v2070 = vpop.f32.mrb[0].mxu0
    %v2071 = vadd.f32 %v1947, %v2070
    %v2072 = vpop.f32.mrb[0].mxu0
    %v2073 = vadd.f32 %v1943, %v2072
    %v2074 = vpop.f32.mrb[0].mxu0
    %v2075 = vadd.f32 %v1947, %v2074
    %2076 = vmatprep.mubr.bf16.mxu0 0
    %2077 = vmatmul.mubr.bf16.gmra.mrb[0].mxu0 %v1986
    %v2078 = vpop.f32.mrb[0].mxu0
    %v2079 = vadd.f32 %v1943, %v2078
    %v2080 = vpop.f32.mrb[0].mxu0
    %v2081 = vadd.f32 %v1947, %v2080
    %v2082 = vpop.f32.mrb[0].mxu0
    %v2083 = vadd.f32 %v1943, %v2082
    %v2084 = vpop.f32.mrb[0].mxu0
    %v2085 = vadd.f32 %v1947, %v2084
    %2086 = vmatprep.mubr.bf16.mxu0 0
    %2087 = vmatmul.mubr.bf16.gmra.mrb[0].mxu0 %v1989
    %v2088 = vpop.f32.mrb[0].mxu0
    %v2089 = vadd.f32 %v1943, %v2088
    %v2090 = vpop.f32.mrb[0].mxu0
    %v2091 = vadd.f32 %v1947, %v2090
    %v2092 = vpop.f32.mrb[0].mxu0
    %v2093 = vadd.f32 %v1943, %v2092
    %v2094 = vpop.f32.mrb[0].mxu0
    %v2095 = vadd.f32 %v1947, %v2094
    %2096 = vmatprep.mubr.bf16.mxu0 0
    %2097 = vmatmul.mubr.bf16.gmra.mrb[0].mxu0 %v1992
    %v2098 = vpop.f32.mrb[0].mxu0
    %v2099 = vadd.f32 %v1943, %v2098
    %v2100 = vpop.f32.mrb[0].mxu0
    %v2101 = vadd.f32 %v1947, %v2100
    %v2102 = vpop.f32.mrb[0].mxu0
    %v2103 = vadd.f32 %v1943, %v2102
    %v2104 = vpop.f32.mrb[0].mxu0
    %v2105 = vadd.f32 %v1947, %v2104
    %2106 = vdwg.mxu0
    %vm2107 = vcmp.ge.f32.partialorder %v2029, 0.0
    %vm2108 = vcmp.ge.f32.partialorder %v2031, 0.0
    %vm2109 = vcmp.ge.f32.partialorder %v2033, 0.0
    %vm2110 = vcmp.ge.f32.partialorder %v2035, 0.0
    %vm2111 = vcmp.ge.f32.partialorder %v2039, 0.0
    %vm2112 = vcmp.ge.f32.partialorder %v2041, 0.0
    %vm2113 = vcmp.ge.f32.partialorder %v2043, 0.0
    %vm2114 = vcmp.ge.f32.partialorder %v2045, 0.0
    %vm2115 = vcmp.ge.f32.partialorder %v2049, 0.0
    %vm2116 = vcmp.ge.f32.partialorder %v2051, 0.0
    %vm2117 = vcmp.ge.f32.partialorder %v2053, 0.0
    %vm2118 = vcmp.ge.f32.partialorder %v2055, 0.0
    %vm2119 = vcmp.ge.f32.partialorder %v2059, 0.0
    %vm2120 = vcmp.ge.f32.partialorder %v2061, 0.0
    %vm2121 = vcmp.ge.f32.partialorder %v2063, 0.0
    %vm2122 = vcmp.ge.f32.partialorder %v2065, 0.0
    %vm2123 = vcmp.ge.f32.partialorder %v2069, 0.0
    %vm2124 = vcmp.ge.f32.partialorder %v2071, 0.0
    %vm2125 = vcmp.ge.f32.partialorder %v2073, 0.0
    %vm2126 = vcmp.ge.f32.partialorder %v2075, 0.0
    %vm2127 = vcmp.ge.f32.partialorder %v2079, 0.0
    %vm2128 = vcmp.ge.f32.partialorder %v2081, 0.0
    %vm2129 = vcmp.ge.f32.partialorder %v2083, 0.0
    %vm2130 = vcmp.ge.f32.partialorder %v2085, 0.0
    %vm2131 = vcmp.ge.f32.partialorder %v2089, 0.0
    %vm2132 = vcmp.ge.f32.partialorder %v2091, 0.0
    %vm2133 = vcmp.ge.f32.partialorder %v2093, 0.0
    %vm2134 = vcmp.ge.f32.partialorder %v2095, 0.0
    %vm2135 = vcmp.ge.f32.partialorder %v2099, 0.0
    %vm2136 = vcmp.ge.f32.partialorder %v2101, 0.0
    %vm2137 = vcmp.ge.f32.partialorder %v2103, 0.0
    %vm2138 = vcmp.ge.f32.partialorder %v2105, 0.0
    %v2139 = vmul.f32 %v2029, 0.1
    %v2140 = vmul.f32 %v2031, 0.1
    %v2141 = vmul.f32 %v2033, 0.1
    %v2142 = vmul.f32 %v2035, 0.1
    %v2143 = vmul.f32 %v2039, 0.1
    %v2144 = vmul.f32 %v2041, 0.1
    %v2145 = vmul.f32 %v2043, 0.1
    %v2146 = vmul.f32 %v2045, 0.1
    %v2147 = vmul.f32 %v2049, 0.1
    %v2148 = vmul.f32 %v2051, 0.1
    %v2149 = vmul.f32 %v2053, 0.1
    %v2150 = vmul.f32 %v2055, 0.1
    %v2151 = vmul.f32 %v2059, 0.1
    %v2152 = vmul.f32 %v2061, 0.1
    %v2153 = vmul.f32 %v2063, 0.1
    %v2154 = vmul.f32 %v2065, 0.1
    %v2155 = vmul.f32 %v2069, 0.1
    %v2156 = vmul.f32 %v2071, 0.1
    %v2157 = vmul.f32 %v2073, 0.1
    %v2158 = vmul.f32 %v2075, 0.1
    %v2159 = vmul.f32 %v2079, 0.1
    %v2160 = vmul.f32 %v2081, 0.1
    %v2161 = vmul.f32 %v2083, 0.1
    %v2162 = vmul.f32 %v2085, 0.1
    %v2163 = vmul.f32 %v2089, 0.1
    %v2164 = vmul.f32 %v2091, 0.1
    %v2165 = vmul.f32 %v2093, 0.1
    %v2166 = vmul.f32 %v2095, 0.1
    %v2167 = vmul.f32 %v2099, 0.1
    %v2168 = vmul.f32 %v2101, 0.1
    %v2169 = vmul.f32 %v2103, 0.1
    %v2170 = vmul.f32 %v2105, 0.1
    %v2171 = vsel %vm2107, %v2029, %v2139
    %v2172 = vsel %vm2108, %v2031, %v2140
    %v2173 = vsel %vm2109, %v2033, %v2141
    %v2174 = vsel %vm2110, %v2035, %v2142
    %v2175 = vsel %vm2111, %v2039, %v2143
    %v2176 = vsel %vm2112, %v2041, %v2144
    %v2177 = vsel %vm2113, %v2043, %v2145
    %v2178 = vsel %vm2114, %v2045, %v2146
    %v2179 = vsel %vm2115, %v2049, %v2147
    %v2180 = vsel %vm2116, %v2051, %v2148
    %v2181 = vsel %vm2117, %v2053, %v2149
    %v2182 = vsel %vm2118, %v2055, %v2150
    %v2183 = vsel %vm2119, %v2059, %v2151
    %v2184 = vsel %vm2120, %v2061, %v2152
    %v2185 = vsel %vm2121, %v2063, %v2153
    %v2186 = vsel %vm2122, %v2065, %v2154
    %v2187 = vsel %vm2123, %v2069, %v2155
    %v2188 = vsel %vm2124, %v2071, %v2156
    %v2189 = vsel %vm2125, %v2073, %v2157
    %v2190 = vsel %vm2126, %v2075, %v2158
    %v2191 = vsel %vm2127, %v2079, %v2159
    %v2192 = vsel %vm2128, %v2081, %v2160
    %v2193 = vsel %vm2129, %v2083, %v2161
    %v2194 = vsel %vm2130, %v2085, %v2162
    %v2195 = vsel %vm2131, %v2089, %v2163
    %v2196 = vsel %vm2132, %v2091, %v2164
    %v2197 = vsel %vm2133, %v2093, %v2165
    %v2198 = vsel %vm2134, %v2095, %v2166
    %v2199 = vsel %vm2135, %v2099, %v2167
    %v2200 = vsel %vm2136, %v2101, %v2168
    %v2201 = vsel %vm2137, %v2103, %v2169
    %v2202 = vsel %vm2138, %v2105, %v2170
    %v2203 = vpack.c.bf16 %v2173, %v2171
    %v2204 = vpack.c.bf16 %v2174, %v2172
    %v2205 = vpack.c.bf16 %v2177, %v2175
    %v2206 = vpack.c.bf16 %v2178, %v2176
    %v2207 = vpack.c.bf16 %v2181, %v2179
    %v2208 = vpack.c.bf16 %v2182, %v2180
    %v2209 = vpack.c.bf16 %v2185, %v2183
    %v2210 = vpack.c.bf16 %v2186, %v2184
    %v2211 = vpack.c.bf16 %v2189, %v2187
    %v2212 = vpack.c.bf16 %v2190, %v2188
    %v2213 = vpack.c.bf16 %v2193, %v2191
    %v2214 = vpack.c.bf16 %v2194, %v2192
    %v2215 = vpack.c.bf16 %v2197, %v2195
    %v2216 = vpack.c.bf16 %v2198, %v2196
    %v2217 = vpack.c.bf16 %v2201, %v2199
    %v2218 = vpack.c.bf16 %v2202, %v2200
    %v2219 = vld [vmem:[%s6] sm:$0xf]
    %v2220 = vld [vmem:[%s6 + $0x4] sm:$0xf]
    %v2221 = vld [vmem:[%s6 + $0x8] sm:$0xf]
    %v2222 = vld [vmem:[%s6 + $0xc] sm:$0xf]
    %v2223 = vld [vmem:[%s6 + $0x10] sm:$0xf]
    %v2224 = vld [vmem:[%s6 + $0x14] sm:$0xf]
    %v2225 = vld [vmem:[%s6 + $0x18] sm:$0xf]
    %v2226 = vld [vmem:[%s6 + $0x1c] sm:$0xf]
    %v2227 = vld [vmem:[%s6 + $0x20] sm:$0xf]
    %v2228 = vld [vmem:[%s6 + $0x24] sm:$0xf]
    %v2229 = vld [vmem:[%s6 + $0x28] sm:$0xf]
    %v2230 = vld [vmem:[%s6 + $0x2c] sm:$0xf]
    %v2231 = vld [vmem:[%s6 + $0x30] sm:$0xf]
    %v2232 = vld [vmem:[%s6 + $0x34] sm:$0xf]
    %v2233 = vld [vmem:[%s6 + $0x38] sm:$0xf]
    %v2234 = vld [vmem:[%s6 + $0x3c] sm:$0xf]
    %v2235 = vld [vmem:[%s6 + $0x40] sm:$0xf]
    %v2236 = vld [vmem:[%s6 + $0x44] sm:$0xf]
    %v2237 = vld [vmem:[%s6 + $0x48] sm:$0xf]
    %v2238 = vld [vmem:[%s6 + $0x4c] sm:$0xf]
    %v2239 = vld [vmem:[%s6 + $0x50] sm:$0xf]
    %v2240 = vld [vmem:[%s6 + $0x54] sm:$0xf]
    %v2241 = vld [vmem:[%s6 + $0x58] sm:$0xf]
    %v2242 = vld [vmem:[%s6 + $0x5c] sm:$0xf]
    %v2243 = vld [vmem:[%s6 + $0x60] sm:$0xf]
    %v2244 = vld [vmem:[%s6 + $0x64] sm:$0xf]
    %v2245 = vld [vmem:[%s6 + $0x68] sm:$0xf]
    %v2246 = vld [vmem:[%s6 + $0x6c] sm:$0xf]
    %v2247 = vld [vmem:[%s6 + $0x70] sm:$0xf]
    %v2248 = vld [vmem:[%s6 + $0x74] sm:$0xf]
    %v2249 = vld [vmem:[%s6 + $0x78] sm:$0xf]
    %v2250 = vld [vmem:[%s6 + $0x7c] sm:$0xf]
    %v2251 = vld [vmem:[%s7] sm:$0x1]
    %v2253 = vlaneseq
    %v2254 = vshrl.u32 %v2253, 7
    %v2255 = vsub.s32 0, %v2254
    %v2256 = vrot.slane %v2251, %v2255
    %v2290 = vunpack.c.l.b16 %v2219
    %v2291 = vunpack.c.l.b16 %v2220
    %v2292 = vunpack.c.l.b16 %v2221
    %v2293 = vunpack.c.l.b16 %v2222
    %v2294 = vunpack.c.l.b16 %v2223
    %v2295 = vunpack.c.l.b16 %v2224
    %v2296 = vunpack.c.l.b16 %v2225
    %v2297 = vunpack.c.l.b16 %v2226
    %v2298 = vunpack.c.l.b16 %v2227
    %v2299 = vunpack.c.l.b16 %v2228
    %v2300 = vunpack.c.l.b16 %v2229
    %v2301 = vunpack.c.l.b16 %v2230
    %v2302 = vunpack.c.l.b16 %v2231
    %v2303 = vunpack.c.l.b16 %v2232
    %v2304 = vunpack.c.l.b16 %v2233
    %v2305 = vunpack.c.l.b16 %v2234
    %v2306 = vunpack.c.l.b16 %v2235
    %v2307 = vunpack.c.l.b16 %v2236
    %v2308 = vunpack.c.l.b16 %v2237
    %v2309 = vunpack.c.l.b16 %v2238
    %v2310 = vunpack.c.l.b16 %v2239
    %v2311 = vunpack.c.l.b16 %v2240
    %v2312 = vunpack.c.l.b16 %v2241
    %v2313 = vunpack.c.l.b16 %v2242
    %v2314 = vunpack.c.l.b16 %v2243
    %v2315 = vunpack.c.l.b16 %v2244
    %v2316 = vunpack.c.l.b16 %v2245
    %v2317 = vunpack.c.l.b16 %v2246
    %v2318 = vunpack.c.l.b16 %v2247
    %v2319 = vunpack.c.l.b16 %v2248
    %v2320 = vunpack.c.l.b16 %v2249
    %v2321 = vunpack.c.l.b16 %v2250
    %v2322 = vpack.c.b16 %v2291, %v2290
    %v2323 = vpack.c.b16 %v2293, %v2292
    %v2324 = vpack.c.b16 %v2295, %v2294
    %v2325 = vpack.c.b16 %v2297, %v2296
    %v2326 = vpack.c.b16 %v2299, %v2298
    %v2327 = vpack.c.b16 %v2301, %v2300
    %v2328 = vpack.c.b16 %v2303, %v2302
    %v2329 = vpack.c.b16 %v2305, %v2304
    %v2330 = vpack.c.b16 %v2307, %v2306
    %v2331 = vpack.c.b16 %v2309, %v2308
    %v2332 = vpack.c.b16 %v2311, %v2310
    %v2333 = vpack.c.b16 %v2313, %v2312
    %v2334 = vpack.c.b16 %v2315, %v2314
    %v2335 = vpack.c.b16 %v2317, %v2316
    %v2336 = vpack.c.b16 %v2319, %v2318
    %v2337 = vpack.c.b16 %v2321, %v2320
    %2354 = vmatprep.subr.bf16.mxu0 0
    %2355 = vmatpush1.bf16.msra.mxu0 %v2322
    %2356 = vmatprep.subr.bf16.mxu0 0
    %2357 = vmatpush1.bf16.msra.mxu0 %v2323
    %2358 = vmatprep.subr.bf16.mxu0 0
    %2359 = vmatpush1.bf16.msra.mxu0 %v2324
    %2360 = vmatprep.subr.bf16.mxu0 0
    %2361 = vmatpush1.bf16.msra.mxu0 %v2325
    %2362 = vmatprep.subr.bf16.mxu0 0
    %2363 = vmatpush1.bf16.msra.mxu0 %v2326
    %2364 = vmatprep.subr.bf16.mxu0 0
    %2365 = vmatpush1.bf16.msra.mxu0 %v2327
    %2366 = vmatprep.subr.bf16.mxu0 0
    %2367 = vmatpush1.bf16.msra.mxu0 %v2328
    %2368 = vmatprep.subr.bf16.mxu0 0
    %2369 = vmatpush1.bf16.msra.mxu0 %v2329
    %2370 = vmatprep.subr.bf16.mxu0 0
    %2371 = vmatpush1.bf16.msra.mxu0 %v2330
    %2372 = vmatprep.subr.bf16.mxu0 0
    %2373 = vmatpush1.bf16.msra.mxu0 %v2331
    %2374 = vmatprep.subr.bf16.mxu0 0
    %2375 = vmatpush1.bf16.msra.mxu0 %v2332
    %2376 = vmatprep.subr.bf16.mxu0 0
    %2377 = vmatpush1.bf16.msra.mxu0 %v2333
    %2378 = vmatprep.subr.bf16.mxu0 0
    %2379 = vmatpush1.bf16.msra.mxu0 %v2334
    %2380 = vmatprep.subr.bf16.mxu0 0
    %2381 = vmatpush1.bf16.msra.mxu0 %v2335
    %2382 = vmatprep.subr.bf16.mxu0 0
    %2383 = vmatpush1.bf16.msra.mxu0 %v2336
    %2384 = vmatprep.subr.bf16.mxu0 0
    %2385 = vmatpush1.bf16.msra.mxu0 %v2337
    %2386 = vmatprep.mubr.bf16.mxu0 %v2204
    %2387 = vmatmul.mubr.bf16.gmra.mrb[0].mxu0 %v2203
    %v2388 = vpop.f32.mrb[0].mxu0
    %v2389 = vadd.f32 %v2256, %v2388
    %v2390 = vpop.f32.mrb[0].mxu0
    %v2391 = vpop.f32.mrb[0].mxu0
    %v2392 = vadd.f32 %v2256, %v2391
    %v2393 = vpop.f32.mrb[0].mxu0
    %2394 = vmatprep.mubr.bf16.mxu0 %v2206
    %2395 = vmatmul.mubr.bf16.gmra.mrb[0].mxu0 %v2205
    %v2396 = vpop.f32.mrb[0].mxu0
    %v2397 = vadd.f32 %v2256, %v2396
    %v2398 = vpop.f32.mrb[0].mxu0
    %v2399 = vpop.f32.mrb[0].mxu0
    %v2400 = vadd.f32 %v2256, %v2399
    %v2401 = vpop.f32.mrb[0].mxu0
    %2402 = vmatprep.mubr.bf16.mxu0 %v2208
    %2403 = vmatmul.mubr.bf16.gmra.mrb[0].mxu0 %v2207
    %v2404 = vpop.f32.mrb[0].mxu0
    %v2405 = vadd.f32 %v2256, %v2404
    %v2406 = vpop.f32.mrb[0].mxu0
    %v2407 = vpop.f32.mrb[0].mxu0
    %v2408 = vadd.f32 %v2256, %v2407
    %v2409 = vpop.f32.mrb[0].mxu0
    %2410 = vmatprep.mubr.bf16.mxu0 %v2210
    %2411 = vmatmul.mubr.bf16.gmra.mrb[0].mxu0 %v2209
    %v2412 = vpop.f32.mrb[0].mxu0
    %v2413 = vadd.f32 %v2256, %v2412
    %v2414 = vpop.f32.mrb[0].mxu0
    %v2415 = vpop.f32.mrb[0].mxu0
    %v2416 = vadd.f32 %v2256, %v2415
    %v2417 = vpop.f32.mrb[0].mxu0
    %2418 = vmatprep.mubr.bf16.mxu0 %v2212
    %2419 = vmatmul.mubr.bf16.gmra.mrb[0].mxu0 %v2211
    %v2420 = vpop.f32.mrb[0].mxu0
    %v2421 = vadd.f32 %v2256, %v2420
    %v2422 = vpop.f32.mrb[0].mxu0
    %v2423 = vpop.f32.mrb[0].mxu0
    %v2424 = vadd.f32 %v2256, %v2423
    %v2425 = vpop.f32.mrb[0].mxu0
    %2426 = vmatprep.mubr.bf16.mxu0 %v2214
    %2427 = vmatmul.mubr.bf16.gmra.mrb[0].mxu0 %v2213
    %v2428 = vpop.f32.mrb[0].mxu0
    %v2429 = vadd.f32 %v2256, %v2428
    %v2430 = vpop.f32.mrb[0].mxu0
    %v2431 = vpop.f32.mrb[0].mxu0
    %v2432 = vadd.f32 %v2256, %v2431
    %v2433 = vpop.f32.mrb[0].mxu0
    %2434 = vmatprep.mubr.bf16.mxu0 %v2216
    %2435 = vmatmul.mubr.bf16.gmra.mrb[0].mxu0 %v2215
    %v2436 = vpop.f32.mrb[0].mxu0
    %v2437 = vadd.f32 %v2256, %v2436
    %v2438 = vpop.f32.mrb[0].mxu0
    %v2439 = vpop.f32.mrb[0].mxu0
    %v2440 = vadd.f32 %v2256, %v2439
    %v2441 = vpop.f32.mrb[0].mxu0
    %2442 = vmatprep.mubr.bf16.mxu0 %v2218
    %2443 = vmatmul.mubr.bf16.gmra.mrb[0].mxu0 %v2217
    %v2444 = vpop.f32.mrb[0].mxu0
    %v2445 = vadd.f32 %v2256, %v2444
    %v2446 = vpop.f32.mrb[0].mxu0
    %v2447 = vpop.f32.mrb[0].mxu0
    %v2448 = vadd.f32 %v2256, %v2447
    %v2449 = vpop.f32.mrb[0].mxu0
    %2450 = vdwg.mxu0
    %vm2451 = vcmp.ge.f32.partialorder %v2389, 0.0
    %vm2452 = vcmp.ge.f32.partialorder %v2392, 0.0
    %vm2453 = vcmp.ge.f32.partialorder %v2397, 0.0
    %vm2454 = vcmp.ge.f32.partialorder %v2400, 0.0
    %vm2455 = vcmp.ge.f32.partialorder %v2405, 0.0
    %vm2456 = vcmp.ge.f32.partialorder %v2408, 0.0
    %vm2457 = vcmp.ge.f32.partialorder %v2413, 0.0
    %vm2458 = vcmp.ge.f32.partialorder %v2416, 0.0
    %vm2459 = vcmp.ge.f32.partialorder %v2421, 0.0
    %vm2460 = vcmp.ge.f32.partialorder %v2424, 0.0
    %vm2461 = vcmp.ge.f32.partialorder %v2429, 0.0
    %vm2462 = vcmp.ge.f32.partialorder %v2432, 0.0
    %vm2463 = vcmp.ge.f32.partialorder %v2437, 0.0
    %vm2464 = vcmp.ge.f32.partialorder %v2440, 0.0
    %vm2465 = vcmp.ge.f32.partialorder %v2445, 0.0
    %vm2466 = vcmp.ge.f32.partialorder %v2448, 0.0
    %v2467 = vmul.f32 %v2389, 0.1
    %v2468 = vmul.f32 %v2392, 0.1
    %v2469 = vmul.f32 %v2397, 0.1
    %v2470 = vmul.f32 %v2400, 0.1
    %v2471 = vmul.f32 %v2405, 0.1
    %v2472 = vmul.f32 %v2408, 0.1
    %v2473 = vmul.f32 %v2413, 0.1
    %v2474 = vmul.f32 %v2416, 0.1
    %v2475 = vmul.f32 %v2421, 0.1
    %v2476 = vmul.f32 %v2424, 0.1
    %v2477 = vmul.f32 %v2429, 0.1
    %v2478 = vmul.f32 %v2432, 0.1
    %v2479 = vmul.f32 %v2437, 0.1
    %v2480 = vmul.f32 %v2440, 0.1
    %v2481 = vmul.f32 %v2445, 0.1
    %v2482 = vmul.f32 %v2448, 0.1
    %v2483 = vsel %vm2451, %v2389, %v2467
    %v2484 = vsel %vm2452, %v2392, %v2468
    %v2485 = vsel %vm2453, %v2397, %v2469
    %v2486 = vsel %vm2454, %v2400, %v2470
    %v2487 = vsel %vm2455, %v2405, %v2471
    %v2488 = vsel %vm2456, %v2408, %v2472
    %v2489 = vsel %vm2457, %v2413, %v2473
    %v2490 = vsel %vm2458, %v2416, %v2474
    %v2491 = vsel %vm2459, %v2421, %v2475
    %v2492 = vsel %vm2460, %v2424, %v2476
    %v2493 = vsel %vm2461, %v2429, %v2477
    %v2494 = vsel %vm2462, %v2432, %v2478
    %v2495 = vsel %vm2463, %v2437, %v2479
    %v2496 = vsel %vm2464, %v2440, %v2480
    %v2497 = vsel %vm2465, %v2445, %v2481
    %v2498 = vsel %vm2466, %v2448, %v2482
    %v2499 = vpack.c.bf16 %v2484, %v2483
    %v2500 = vpack.c.bf16 %v2486, %v2485
    %v2501 = vpack.c.bf16 %v2488, %v2487
    %v2502 = vpack.c.bf16 %v2490, %v2489
    %v2503 = vpack.c.bf16 %v2492, %v2491
    %v2504 = vpack.c.bf16 %v2494, %v2493
    %v2505 = vpack.c.bf16 %v2496, %v2495
    %v2506 = vpack.c.bf16 %v2498, %v2497
    %v2507 = vld [vmem:[%s8] sm:$0xf]
    %v2508 = vld [vmem:[%s8 + $0x4] sm:$0xf]
    %v2509 = vld [vmem:[%s8 + $0x8] sm:$0xf]
    %v2510 = vld [vmem:[%s8 + $0xc] sm:$0xf]
    %v2511 = vld [vmem:[%s8 + $0x10] sm:$0xf]
    %v2512 = vld [vmem:[%s8 + $0x14] sm:$0xf]
    %v2513 = vld [vmem:[%s8 + $0x18] sm:$0xf]
    %v2514 = vld [vmem:[%s8 + $0x1c] sm:$0xf]
    %v2515 = vld [vmem:[%s8 + $0x20] sm:$0xf]
    %v2516 = vld [vmem:[%s8 + $0x24] sm:$0xf]
    %v2517 = vld [vmem:[%s8 + $0x28] sm:$0xf]
    %v2518 = vld [vmem:[%s8 + $0x2c] sm:$0xf]
    %v2519 = vld [vmem:[%s8 + $0x30] sm:$0xf]
    %v2520 = vld [vmem:[%s8 + $0x34] sm:$0xf]
    %v2521 = vld [vmem:[%s8 + $0x38] sm:$0xf]
    %v2522 = vld [vmem:[%s8 + $0x3c] sm:$0xf]
    %v2523 = vld [vmem:[%s9] sm:$0x1]
    %v2525 = vlaneseq
    %v2526 = vshrl.u32 %v2525, 7
    %v2527 = vsub.s32 0, %v2526
    %v2528 = vrot.slane %v2523, %v2527
    %v2546 = vunpack.c.l.b16 %v2507
    %v2547 = vunpack.c.l.b16 %v2508
    %v2548 = vunpack.c.l.b16 %v2509
    %v2549 = vunpack.c.l.b16 %v2510
    %v2550 = vunpack.c.l.b16 %v2511
    %v2551 = vunpack.c.l.b16 %v2512
    %v2552 = vunpack.c.l.b16 %v2513
    %v2553 = vunpack.c.l.b16 %v2514
    %v2554 = vunpack.c.l.b16 %v2515
    %v2555 = vunpack.c.l.b16 %v2516
    %v2556 = vunpack.c.l.b16 %v2517
    %v2557 = vunpack.c.l.b16 %v2518
    %v2558 = vunpack.c.l.b16 %v2519
    %v2559 = vunpack.c.l.b16 %v2520
    %v2560 = vunpack.c.l.b16 %v2521
    %v2561 = vunpack.c.l.b16 %v2522
    %v2562 = vpack.c.b16 %v2547, %v2546
    %v2563 = vpack.c.b16 %v2549, %v2548
    %v2564 = vpack.c.b16 %v2551, %v2550
    %v2565 = vpack.c.b16 %v2553, %v2552
    %v2566 = vpack.c.b16 %v2555, %v2554
    %v2567 = vpack.c.b16 %v2557, %v2556
    %v2568 = vpack.c.b16 %v2559, %v2558
    %v2569 = vpack.c.b16 %v2561, %v2560
    %2578 = vmatprep.subr.bf16.mxu0 0
    %2579 = vmatpush1.bf16.msra.mxu0 %v2562
    %2580 = vmatprep.subr.bf16.mxu0 0
    %2581 = vmatpush1.bf16.msra.mxu0 %v2563
    %2582 = vmatprep.subr.bf16.mxu0 0
    %2583 = vmatpush1.bf16.msra.mxu0 %v2564
    %2584 = vmatprep.subr.bf16.mxu0 0
    %2585 = vmatpush1.bf16.msra.mxu0 %v2565
    %2586 = vmatprep.subr.bf16.mxu0 0
    %2587 = vmatpush1.bf16.msra.mxu0 %v2566
    %2588 = vmatprep.subr.bf16.mxu0 0
    %2589 = vmatpush1.bf16.msra.mxu0 %v2567
    %2590 = vmatprep.subr.bf16.mxu0 0
    %2591 = vmatpush1.bf16.msra.mxu0 %v2568
    %2592 = vmatprep.subr.bf16.mxu0 0
    %2593 = vmatpush1.bf16.msra.mxu0 %v2569
    %2594 = vmatprep.subr.bf16.mxu0 0
    %2595 = vmatpush1.bf16.msra.mxu0 0
    %2596 = vmatprep.subr.bf16.mxu0 0
    %2597 = vmatpush1.bf16.msra.mxu0 0
    %2598 = vmatprep.subr.bf16.mxu0 0
    %2599 = vmatpush1.bf16.msra.mxu0 0
    %2600 = vmatprep.subr.bf16.mxu0 0
    %2601 = vmatpush1.bf16.msra.mxu0 0
    %2602 = vmatprep.subr.bf16.mxu0 0
    %2603 = vmatpush1.bf16.msra.mxu0 0
    %2604 = vmatprep.subr.bf16.mxu0 0
    %2605 = vmatpush1.bf16.msra.mxu0 0
    %2606 = vmatprep.subr.bf16.mxu0 0
    %2607 = vmatpush1.bf16.msra.mxu0 0
    %2608 = vmatprep.subr.bf16.mxu0 0
    %2609 = vmatpush1.bf16.msra.mxu0 0
    %2610 = vmatprep.mubr.bf16.mxu0 0
    %2611 = vmatmul.mubr.bf16.gmra.mrb[0].mxu0 %v2499
    %v2612 = vpop.f32.mrb[0].mxu0
    %v2613 = vadd.f32 %v2528, %v2612
    %v2614 = vpop.f32.mrb[0].mxu0
    %v2615 = vpop.f32.mrb[0].mxu0
    %v2616 = vadd.f32 %v2528, %v2615
    %v2617 = vpop.f32.mrb[0].mxu0
    %2618 = vmatprep.mubr.bf16.mxu0 0
    %2619 = vmatmul.mubr.bf16.gmra.mrb[0].mxu0 %v2500
    %v2620 = vpop.f32.mrb[0].mxu0
    %v2621 = vadd.f32 %v2528, %v2620
    %v2622 = vpop.f32.mrb[0].mxu0
    %v2623 = vpop.f32.mrb[0].mxu0
    %v2624 = vadd.f32 %v2528, %v2623
    %v2625 = vpop.f32.mrb[0].mxu0
    %2626 = vmatprep.mubr.bf16.mxu0 0
    %2627 = vmatmul.mubr.bf16.gmra.mrb[0].mxu0 %v2501
    %v2628 = vpop.f32.mrb[0].mxu0
    %v2629 = vadd.f32 %v2528, %v2628
    %v2630 = vpop.f32.mrb[0].mxu0
    %v2631 = vpop.f32.mrb[0].mxu0
    %v2632 = vadd.f32 %v2528, %v2631
    %v2633 = vpop.f32.mrb[0].mxu0
    %2634 = vmatprep.mubr.bf16.mxu0 0
    %2635 = vmatmul.mubr.bf16.gmra.mrb[0].mxu0 %v2502
    %v2636 = vpop.f32.mrb[0].mxu0
    %v2637 = vadd.f32 %v2528, %v2636
    %v2638 = vpop.f32.mrb[0].mxu0
    %v2639 = vpop.f32.mrb[0].mxu0
    %v2640 = vadd.f32 %v2528, %v2639
    %v2641 = vpop.f32.mrb[0].mxu0
    %2642 = vmatprep.mubr.bf16.mxu0 0
    %2643 = vmatmul.mubr.bf16.gmra.mrb[0].mxu0 %v2503
    %v2644 = vpop.f32.mrb[0].mxu0
    %v2645 = vadd.f32 %v2528, %v2644
    %v2646 = vpop.f32.mrb[0].mxu0
    %v2647 = vpop.f32.mrb[0].mxu0
    %v2648 = vadd.f32 %v2528, %v2647
    %v2649 = vpop.f32.mrb[0].mxu0
    %2650 = vmatprep.mubr.bf16.mxu0 0
    %2651 = vmatmul.mubr.bf16.gmra.mrb[0].mxu0 %v2504
    %v2652 = vpop.f32.mrb[0].mxu0
    %v2653 = vadd.f32 %v2528, %v2652
    %v2654 = vpop.f32.mrb[0].mxu0
    %v2655 = vpop.f32.mrb[0].mxu0
    %v2656 = vadd.f32 %v2528, %v2655
    %v2657 = vpop.f32.mrb[0].mxu0
    %2658 = vmatprep.mubr.bf16.mxu0 0
    %2659 = vmatmul.mubr.bf16.gmra.mrb[0].mxu0 %v2505
    %v2660 = vpop.f32.mrb[0].mxu0
    %v2661 = vadd.f32 %v2528, %v2660
    %v2662 = vpop.f32.mrb[0].mxu0
    %v2663 = vpop.f32.mrb[0].mxu0
    %v2664 = vadd.f32 %v2528, %v2663
    %v2665 = vpop.f32.mrb[0].mxu0
    %2666 = vmatprep.mubr.bf16.mxu0 0
    %2667 = vmatmul.mubr.bf16.gmra.mrb[0].mxu0 %v2506
    %v2668 = vpop.f32.mrb[0].mxu0
    %v2669 = vadd.f32 %v2528, %v2668
    %v2670 = vpop.f32.mrb[0].mxu0
    %v2671 = vpop.f32.mrb[0].mxu0
    %v2672 = vadd.f32 %v2528, %v2671
    %v2673 = vpop.f32.mrb[0].mxu0
    %2674 = vdwg.mxu0
    %vm2675 = vcmp.ge.f32.partialorder %v2613, 0.0
    %vm2676 = vcmp.ge.f32.partialorder %v2616, 0.0
    %vm2677 = vcmp.ge.f32.partialorder %v2621, 0.0
    %vm2678 = vcmp.ge.f32.partialorder %v2624, 0.0
    %vm2679 = vcmp.ge.f32.partialorder %v2629, 0.0
    %vm2680 = vcmp.ge.f32.partialorder %v2632, 0.0
    %vm2681 = vcmp.ge.f32.partialorder %v2637, 0.0
    %vm2682 = vcmp.ge.f32.partialorder %v2640, 0.0
    %vm2683 = vcmp.ge.f32.partialorder %v2645, 0.0
    %vm2684 = vcmp.ge.f32.partialorder %v2648, 0.0
    %vm2685 = vcmp.ge.f32.partialorder %v2653, 0.0
    %vm2686 = vcmp.ge.f32.partialorder %v2656, 0.0
    %vm2687 = vcmp.ge.f32.partialorder %v2661, 0.0
    %vm2688 = vcmp.ge.f32.partialorder %v2664, 0.0
    %vm2689 = vcmp.ge.f32.partialorder %v2669, 0.0
    %vm2690 = vcmp.ge.f32.partialorder %v2672, 0.0
    %v2691 = vmul.f32 %v2613, 0.1
    %v2692 = vmul.f32 %v2616, 0.1
    %v2693 = vmul.f32 %v2621, 0.1
    %v2694 = vmul.f32 %v2624, 0.1
    %v2695 = vmul.f32 %v2629, 0.1
    %v2696 = vmul.f32 %v2632, 0.1
    %v2697 = vmul.f32 %v2637, 0.1
    %v2698 = vmul.f32 %v2640, 0.1
    %v2699 = vmul.f32 %v2645, 0.1
    %v2700 = vmul.f32 %v2648, 0.1
    %v2701 = vmul.f32 %v2653, 0.1
    %v2702 = vmul.f32 %v2656, 0.1
    %v2703 = vmul.f32 %v2661, 0.1
    %v2704 = vmul.f32 %v2664, 0.1
    %v2705 = vmul.f32 %v2669, 0.1
    %v2706 = vmul.f32 %v2672, 0.1
    %v2707 = vsel %vm2675, %v2613, %v2691
    %v2708 = vsel %vm2676, %v2616, %v2692
    %v2709 = vsel %vm2677, %v2621, %v2693
    %v2710 = vsel %vm2678, %v2624, %v2694
    %v2711 = vsel %vm2679, %v2629, %v2695
    %v2712 = vsel %vm2680, %v2632, %v2696
    %v2713 = vsel %vm2681, %v2637, %v2697
    %v2714 = vsel %vm2682, %v2640, %v2698
    %v2715 = vsel %vm2683, %v2645, %v2699
    %v2716 = vsel %vm2684, %v2648, %v2700
    %v2717 = vsel %vm2685, %v2653, %v2701
    %v2718 = vsel %vm2686, %v2656, %v2702
    %v2719 = vsel %vm2687, %v2661, %v2703
    %v2720 = vsel %vm2688, %v2664, %v2704
    %v2721 = vsel %vm2689, %v2669, %v2705
    %v2722 = vsel %vm2690, %v2672, %v2706
    %v2723 = vld [vmem:[%s10] sm:$0x1]
    %v2724 = vpack.c.bf16 %v2708, %v2707
    %v2725 = vpack.c.bf16 %v2710, %v2709
    %v2726 = vpack.c.bf16 %v2712, %v2711
    %v2727 = vpack.c.bf16 %v2714, %v2713
    %v2728 = vpack.c.bf16 %v2716, %v2715
    %v2729 = vpack.c.bf16 %v2718, %v2717
    %v2730 = vpack.c.bf16 %v2720, %v2719
    %v2731 = vpack.c.bf16 %v2722, %v2721
    %vm2732 = vcmask 523264
    %v2734 = vsel %vm2732, %v2723, 0
    %v2737 = vsel %vm2732, %v2724, 0
    %v2740 = vsel %vm2732, %v2725, 0
    %v2743 = vsel %vm2732, %v2726, 0
    %v2746 = vsel %vm2732, %v2727, 0
    %v2749 = vsel %vm2732, %v2728, 0
    %v2752 = vsel %vm2732, %v2729, 0
    %v2755 = vsel %vm2732, %v2730, 0
    %v2758 = vsel %vm2732, %v2731, 0
    %2760 = vmatprep.subr.bf16.mxu0 0
    %2761 = vmatpush1.bf16.xpose.msra.mxu0 %v2737
    %2762 = vmatprep.subr.bf16.mxu0 0
    %2763 = vmatpush1.bf16.xpose.msra.mxu0 %v2740
    %2764 = vmatprep.subr.bf16.mxu0 0
    %2765 = vmatpush1.bf16.xpose.msra.mxu0 %v2743
    %2766 = vmatprep.subr.bf16.mxu0 0
    %2767 = vmatpush1.bf16.xpose.msra.mxu0 %v2746
    %2768 = vmatprep.subr.bf16.mxu0 0
    %2769 = vmatpush1.bf16.xpose.msra.mxu0 %v2749
    %2770 = vmatprep.subr.bf16.mxu0 0
    %2771 = vmatpush1.bf16.xpose.msra.mxu0 %v2752
    %2772 = vmatprep.subr.bf16.mxu0 0
    %2773 = vmatpush1.bf16.xpose.msra.mxu0 %v2755
    %2774 = vmatprep.subr.bf16.mxu0 0
    %2775 = vmatpush1.bf16.xpose.msra.mxu0 %v2758
    %2776 = vmatprep.subr.bf16.mxu0 0
    %2777 = vmatpush1.bf16.xpose.msra.mxu0 0
    %2778 = vmatprep.subr.bf16.mxu0 0
    %2779 = vmatpush1.bf16.xpose.msra.mxu0 0
    %2780 = vmatprep.subr.bf16.mxu0 0
    %2781 = vmatpush1.bf16.xpose.msra.mxu0 0
    %2782 = vmatprep.subr.bf16.mxu0 0
    %2783 = vmatpush1.bf16.xpose.msra.mxu0 0
    %2784 = vmatprep.subr.bf16.mxu0 0
    %2785 = vmatpush1.bf16.xpose.msra.mxu0 0
    %2786 = vmatprep.subr.bf16.mxu0 0
    %2787 = vmatpush1.bf16.xpose.msra.mxu0 0
    %2788 = vmatprep.subr.bf16.mxu0 0
    %2789 = vmatpush1.bf16.xpose.msra.mxu0 0
    %2790 = vmatprep.subr.bf16.mxu0 0
    %2791 = vmatpush1.bf16.xpose.msra.mxu0 0
    %2792 = vmatprep.mubr.bf16.mxu0 0
    %2793 = vmatmul.mubr.bf16.gmra.mrb[0].mxu0 %v2734
    %v2794 = vpop.f32.mrb[0].mxu0
    %v2795 = vadd.f32 0.0, %v2794
    %v2796 = vpop.f32.mrb[0].mxu0
    %v2797 = vpop.f32.mrb[0].mxu0
    %v2798 = vpop.f32.mrb[0].mxu0
    %2799 = vdwg.mxu0
    %v2800 = vtanh.pop %v2795
    %2801 = vst [vmem:[#allocation8] sm:$0x1] %v2800
    // Predicated region
    $region54: #{tpu_custom_call.1} parent=1 // pred_check
      _
    $region55: #{tpu_custom_call.1} parent=1 // pred_check_branch
      %2803 = sbr.rel (0) target = $region57
    $region56: #{tpu_custom_call.1} parent=1 // pred_region
      %s2805 = ssub.s32 2048, 256
      %2806 = vsyncadd [#allocation4], %s2805
      %s2807 = sshll.u32 [#allocation7], 4
      %s2808 = int_to_ptr.vmem [resolvable:$true] %s2807
      %2813 = dma.vmem_to_hbm [thread:$0]  %s2808, 256, %s11, [#allocation4], 128, 128, 8
    $region57: #{tpu_custom_call.1} parent=1 // pred_fallthru
      _
    // Predicated region
    $region58: #{tpu_custom_call.1} parent=1 // pred_check
      _
    $region59: #{tpu_custom_call.1} parent=1 // pred_check_branch
      %2815 = sbr.rel (0) target = $region61
    $region60: #{tpu_custom_call.1} parent=1 // pred_region
      %s2817 = ssub.s32 16, 16
      %2818 = vsyncadd [#allocation9], %s2817
      %s2820 = sshll.u32 [#allocation8], 4
      %s2821 = int_to_ptr.vmem [resolvable:$true] %s2820
      %2823 = dma.vmem_to_hbm [thread:$0]  %s2821, 16, %s12, [#allocation9]
    $region61: #{tpu_custom_call.1} parent=1 // pred_fallthru
      _
    // Predicated region
    $region62: #{tpu_custom_call.1} parent=1 // pred_check
      _
    $region63: #{tpu_custom_call.1} parent=1 // pred_check_branch
      %2825 = sbr.rel (0) target = $region65
    $region64: #{tpu_custom_call.1} parent=1 // pred_region
      %2826 = dma.done [#allocation4], 2048
    $region65: #{tpu_custom_call.1} parent=1 // pred_fallthru
      _
    // Predicated region
    $region66: #{tpu_custom_call.1} parent=1 // pred_check
      _
    $region67: #{tpu_custom_call.1} parent=1 // pred_check_branch
      %2828 = sbr.rel (0) target = $region69
    $region68: #{tpu_custom_call.1} parent=1 // pred_region
      %2829 = dma.done [#allocation9], 16
    $region69: #{tpu_custom_call.1} parent=1 // pred_fallthru
      _
    %2830 = vsyncpa [#allocation3], 1
    %2831 = vsyncpa [#allocation6], 1
    %2832 = vsyncpa [#allocation4], 1
    %2833 = vsyncpa [#allocation9], 1

</llo_original>
